<compile_context>
chip_gen: v6e
topology: v6e:2x2x1
jax: 0.10.0
libtpu: 0.0.40
codegen_flags: <defaults>
</compile_context>

<pallas_src>
import functools

import jax
import jax.numpy as jnp
from jax.experimental import pallas as pl
from jax.experimental.pallas import tpu as pltpu

IN = 2                                   # Linear in_features
OUT = 2                                  # Linear out_features
NCOPY = 4                                # 1 (cat'd z) + 3 (stack([z, z, z]))
PAIRS_PER_ROW = 128 // IN                # 64 batch elements per 128-lane input row
OUT_LANES = PAIRS_PER_ROW * NCOPY * OUT  # 512 output lanes per view-row


def _round_up(a, m):
    return ((a + m - 1) // m) * m


def fused_linear_stack_cat_kernel(x_ref, m_ref, b_ref, out_ref):
    # x_ref:   (rin_blk, 128)  -- 64 interleaved (x0, x1) pairs per row
    # m_ref:   (128, 512)      -- kron(I_64, [W^T|W^T|W^T|W^T]); routes + replicates
    # b_ref:   (1, 512)        -- bias tiled to the output lane pattern
    # out_ref: (rin_blk, 512)  -- per batch element: [z0 z1 z0 z1 z0 z1 z0 z1]
    acc = jnp.dot(
        x_ref[...],
        m_ref[...],
        preferred_element_type=jnp.float32,
        precision=jax.lax.Precision.HIGHEST,
    )
    out_ref[...] = (acc + b_ref[...]).astype(out_ref.dtype)


@functools.partial(jax.jit, static_argnames=("rin_block_max",))
def model_forward(x, w, b, *, rin_block_max=2048):
    """x: (B, 2); w: (2, 2) PyTorch Linear layout (out, in); b: (2,).
    Returns (B, 4, 2) with every row equal to x @ w.T + b."""
    B, in_dim = x.shape
    assert in_dim == IN and w.shape == (OUT, IN) and b.shape == (OUT,), \
        "kernel specialized to Linear(2, 2)"

    # ---- lane-dense tiling over the (., 128) input view --------------------
    rin = _round_up(pl.cdiv(B, PAIRS_PER_ROW), 8)            # rows, multiple of 8
    # >= 2 grid steps when there is enough work (keeps both v7x TCs busy),
    # capped at ~4 MiB of output per step.
    rin_blk = min(rin_block_max, _round_up(pl.cdiv(rin, 2), 8))
    rin = _round_up(rin, rin_blk)                            # grid divides evenly
    grid = (rin // rin_blk,)
    b_pad = rin * PAIRS_PER_ROW

    xf = x.astype(jnp.float32)
    if b_pad != B:
        xf = jnp.pad(xf, ((0, b_pad - B), (0, 0)))
    x_view = xf.reshape(rin, PAIRS_PER_ROW * IN)             # (rin, 128), free reshape

    # ---- fold Linear + stack/cat replication into one routing matmul -------
    # z_t = sum_m x_m * W[t, m] + b[t];  output element (b, copy, t) = z_t.
    w2 = jnp.tile(w.astype(jnp.float32).T, (1, NCOPY))                    # (2, 8)
    m = jnp.kron(jnp.eye(PAIRS_PER_ROW, dtype=jnp.float32), w2)           # (128, 512)
    bias_row = jnp.tile(b.astype(jnp.float32),
                        NCOPY * PAIRS_PER_ROW).reshape(1, OUT_LANES)      # (1, 512)

    out_view = pl.pallas_call(
        fused_linear_stack_cat_kernel,
        out_shape=jax.ShapeDtypeStruct((rin, OUT_LANES), x.dtype),
        grid=grid,
        in_specs=[
            pl.BlockSpec((rin_blk, PAIRS_PER_ROW * IN), lambda i: (i, 0)),
            pl.BlockSpec((PAIRS_PER_ROW * IN, OUT_LANES), lambda i: (0, 0)),
            pl.BlockSpec((1, OUT_LANES), lambda i: (0, 0)),
        ],
        out_specs=pl.BlockSpec((rin_blk, OUT_LANES), lambda i: (i, 0)),
        compiler_params=pltpu.CompilerParams(
            dimension_semantics=("parallel",),
            vmem_limit_bytes=32 * 1024 * 1024,
        ),
    )(x_view, m, bias_row)

    # Lane-dense (rin, 512) -> semantic (b_pad, 4, 2); free row-major reshape.
    out = out_view.reshape(b_pad, NCOPY, OUT)
    if b_pad != B:
        out = out[:B]
    return out


if __name__ == "__main__":
    key = jax.random.PRNGKey(0)
    kx, kw, kb = jax.random.split(key, 3)

    B = 8  # small batch, consistent with the torch spec's x = torch.randn(1, 2)
    x = jax.random.normal(kx, (B, IN), dtype=jnp.float32)
    # Deterministic Linear(2, 2) parameters (PyTorch-style (out, in) weight).
    bound = 1.0 / (IN ** 0.5)
    w = jax.random.uniform(kw, (OUT, IN), dtype=jnp.float32, minval=-bound, maxval=bound)
    b = jax.random.uniform(kb, (OUT,), dtype=jnp.float32, minval=-bound, maxval=bound)

    out = model_forward(x, w, b)
    out = jax.block_until_ready(out)

    # Pure-JAX reference.
    z_ref = x @ w.T + b
    ref = jnp.concatenate([z_ref[:, None, :], jnp.stack([z_ref] * 3, axis=1)], axis=1)
    assert out.shape == (B, NCOPY, OUT), out.shape
    max_err = float(jnp.max(jnp.abs(out - ref)))
    assert jnp.allclose(out, ref, atol=1e-4, rtol=1e-4), f"mismatch vs reference: {max_err}"

    print("KERNEL_OK")
</pallas_src>

<mosaic_0001>
module attributes {stable_mosaic.version = 11 : i64} {
  func.func @fused_linear_stack_cat_kernel(%arg0: i32, %arg1: memref<8x128xf32, #tpu.memory_space<vmem>>, %arg2: memref<128x512xf32, #tpu.memory_space<vmem>>, %arg3: memref<1x512xf32, #tpu.memory_space<vmem>>, %arg4: memref<8x512xf32, #tpu.memory_space<vmem>>) attributes {dimension_semantics = [#tpu.dimension_semantics<parallel>], iteration_bounds = array<i64: 1>, scalar_prefetch = 0 : i64, scratch_operands = 0 : i64, tpu.core_type = #tpu.core_type<tc>, window_params = [{transform_indices = @transform_0, window_bounds = array<i64: 8, 128>}, {pipeline_mode = #tpu.pipeline_mode<synchronous>, transform_indices = @transform_1, window_bounds = array<i64: 128, 512>}, {pipeline_mode = #tpu.pipeline_mode<synchronous>, transform_indices = @transform_2, window_bounds = array<i64: 1, 512>}, {transform_indices = @transform_3, window_bounds = array<i64: 8, 512>}]} {
    %c0 = arith.constant 0 : index
    %c0_0 = arith.constant 0 : index
    %0 = vector.load %arg1[%c0, %c0_0] : memref<8x128xf32, #tpu.memory_space<vmem>>, vector<8x128xf32>
    %c0_1 = arith.constant 0 : index
    %c0_2 = arith.constant 0 : index
    %1 = vector.load %arg2[%c0_1, %c0_2] : memref<128x512xf32, #tpu.memory_space<vmem>>, vector<128x512xf32>
    %cst = arith.constant dense<0.000000e+00> : vector<8x512xf32>
    %2 = tpu.matmul %0, %1, %cst {dimension_numbers = #tpu.dot_dimension_numbers<[1], [0], [0], [1], [0, 0, 1, 1], [], []>, precision = #tpu.contract_precision<fp32>} : vector<8x128xf32>, vector<128x512xf32>, vector<8x512xf32> -> vector<8x512xf32>
    %c0_3 = arith.constant 0 : index
    %c0_4 = arith.constant 0 : index
    %3 = vector.load %arg3[%c0_3, %c0_4] : memref<1x512xf32, #tpu.memory_space<vmem>>, vector<1x512xf32>
    %4 = vector.broadcast %3 : vector<1x512xf32> to vector<8x512xf32>
    %5 = arith.addf %2, %4 : vector<8x512xf32>
    %c0_5 = arith.constant 0 : index
    %c0_6 = arith.constant 0 : index
    %6 = vector.load %arg4[%c0_5, %c0_6] : memref<8x512xf32, #tpu.memory_space<vmem>>, vector<8x512xf32>
    tpu.vector_store %arg4[%c0_5, %c0_6], %5 {strides = array<i32>} : memref<8x512xf32, #tpu.memory_space<vmem>>, vector<8x512xf32>,
    return
  }
  func.func @transform_0(%arg0: i32) -> (i32, i32) {
    %c0_i32 = arith.constant 0 : i32
    %c0_i32_0 = arith.constant 0 : i32
    return %arg0, %c0_i32 : i32, i32
  }
  func.func @transform_1(%arg0: i32) -> (i32, i32) {
    %c0_i32 = arith.constant 0 : i32
    %c0_i32_0 = arith.constant 0 : i32
    %c0_i32_1 = arith.constant 0 : i32
    return %c0_i32, %c0_i32_0 : i32, i32
  }
  func.func @transform_2(%arg0: i32) -> (i32, i32) {
    %c0_i32 = arith.constant 0 : i32
    %c0_i32_0 = arith.constant 0 : i32
    %c0_i32_1 = arith.constant 0 : i32
    return %c0_i32, %c0_i32_0 : i32, i32
  }
  func.func @transform_3(%arg0: i32) -> (i32, i32) {
    %c0_i32 = arith.constant 0 : i32
    %c0_i32_0 = arith.constant 0 : i32
    return %arg0, %c0_i32 : i32, i32
  }
}

</mosaic_0001>

<llo_original>
// kernel: tile.18
$region0: #{tile.18}
  #allocation0 [shape = 's32[1]{0}', space=sflag, size = 0x4, scoped, tag = 'scoped memory for tile.18']
  %s0 = inlined_call_operand.vmem [shape: f32[2], index: 0, kind: input, shape index: {}]
  %s1 = inlined_call_operand.vmem [shape: f32[256,2], index: 1, kind: output, shape index: {}]
  // Predicated region
  $region2: #{tile.18} parent=0 // pred_check
    _
  $region3: #{tile.18} parent=0 // pred_check_branch
    %3 = sbr.rel (0) target = $region5
  $region4: #{tile.18} parent=0 // pred_region
    _
  $region5: #{tile.18} parent=0 // pred_fallthru
    _
  %v4 = vld [vmem:[%s0] ss:$0 sm:$0xff]
  %5 = vst [vmem:[%s1] sm:$0xff] %v4
  %s6 = scalar_lea.vmem %s1, 8
  %7 = vst [vmem:[%s6] sm:$0xff] %v4
  %s8 = scalar_lea.vmem %s1, 16
  %9 = vst [vmem:[%s8] sm:$0xff] %v4
  %s10 = scalar_lea.vmem %s1, 24
  %11 = vst [vmem:[%s10] sm:$0xff] %v4
  %s12 = scalar_lea.vmem %s1, 32
  %13 = vst [vmem:[%s12] sm:$0xff] %v4
  %s14 = scalar_lea.vmem %s1, 40
  %15 = vst [vmem:[%s14] sm:$0xff] %v4
  %s16 = scalar_lea.vmem %s1, 48
  %17 = vst [vmem:[%s16] sm:$0xff] %v4
  %s18 = scalar_lea.vmem %s1, 56
  %19 = vst [vmem:[%s18] sm:$0xff] %v4
  %s20 = scalar_lea.vmem %s1, 64
  %21 = vst [vmem:[%s20] sm:$0xff] %v4
  %s22 = scalar_lea.vmem %s1, 72
  %23 = vst [vmem:[%s22] sm:$0xff] %v4
  %s24 = scalar_lea.vmem %s1, 80
  %25 = vst [vmem:[%s24] sm:$0xff] %v4
  %s26 = scalar_lea.vmem %s1, 88
  %27 = vst [vmem:[%s26] sm:$0xff] %v4
  %s28 = scalar_lea.vmem %s1, 96
  %29 = vst [vmem:[%s28] sm:$0xff] %v4
  %s30 = scalar_lea.vmem %s1, 104
  %31 = vst [vmem:[%s30] sm:$0xff] %v4
  %s32 = scalar_lea.vmem %s1, 112
  %33 = vst [vmem:[%s32] sm:$0xff] %v4
  %s34 = scalar_lea.vmem %s1, 120
  %35 = vst [vmem:[%s34] sm:$0xff] %v4
  %s36 = scalar_lea.vmem %s1, 128
  %37 = vst [vmem:[%s36] sm:$0xff] %v4
  %s38 = scalar_lea.vmem %s1, 136
  %39 = vst [vmem:[%s38] sm:$0xff] %v4
  %s40 = scalar_lea.vmem %s1, 144
  %41 = vst [vmem:[%s40] sm:$0xff] %v4
  %s42 = scalar_lea.vmem %s1, 152
  %43 = vst [vmem:[%s42] sm:$0xff] %v4
  %s44 = scalar_lea.vmem %s1, 160
  %45 = vst [vmem:[%s44] sm:$0xff] %v4
  %s46 = scalar_lea.vmem %s1, 168
  %47 = vst [vmem:[%s46] sm:$0xff] %v4
  %s48 = scalar_lea.vmem %s1, 176
  %49 = vst [vmem:[%s48] sm:$0xff] %v4
  %s50 = scalar_lea.vmem %s1, 184
  %51 = vst [vmem:[%s50] sm:$0xff] %v4
  %s52 = scalar_lea.vmem %s1, 192
  %53 = vst [vmem:[%s52] sm:$0xff] %v4
  %s54 = scalar_lea.vmem %s1, 200
  %55 = vst [vmem:[%s54] sm:$0xff] %v4
  %s56 = scalar_lea.vmem %s1, 208
  %57 = vst [vmem:[%s56] sm:$0xff] %v4
  %s58 = scalar_lea.vmem %s1, 216
  %59 = vst [vmem:[%s58] sm:$0xff] %v4
  %s60 = scalar_lea.vmem %s1, 224
  %61 = vst [vmem:[%s60] sm:$0xff] %v4
  %s62 = scalar_lea.vmem %s1, 232
  %63 = vst [vmem:[%s62] sm:$0xff] %v4
  %s64 = scalar_lea.vmem %s1, 240
  %65 = vst [vmem:[%s64] sm:$0xff] %v4
  %s66 = scalar_lea.vmem %s1, 248
  %67 = vst [vmem:[%s66] sm:$0xff] %v4

// kernel: tile.19
$region0: #{tile.19}
  %s0 = inlined_call_operand.vmem [shape: f32[256,2], index: 0, kind: input, shape index: {}]
  %s1 = inlined_call_operand.vmem [shape: f32[1,512], index: 1, kind: output, shape index: {}]
  $region1: #{tile.19} parent=0
    #allocation0 [shape = 'u8[16384]{0}', space=vmem, size = 0x4000, scoped, tag = 'scoped mem for output reshape']
    %v2 = vld [vmem:[%s0] sm:$0x1]
    %s3 = scalar_lea.vmem %s0, 63
    %v4 = vld [vmem:[%s3] sm:$0x2]
    %vm5 = vcmask 1041409
    %v6 = vsel %vm5, %v4, %v2
    %s7 = scalar_lea.vmem %s0, 126
    %v8 = vld [vmem:[%s7] sm:$0x4]
    %vm9 = vcmask 1042434
    %v10 = vsel %vm9, %v8, %v6
    %s11 = scalar_lea.vmem %s0, 189
    %v12 = vld [vmem:[%s11] sm:$0x8]
    %vm13 = vcmask 1043459
    %v14 = vsel %vm13, %v12, %v10
    %vm15 = vcmask 15360
    %16 = vst.msk [vmem:[#allocation0] ss:$8 sm:$0xf] %vm15, %v14
    %s17 = scalar_lea.vmem %s0, 63
    %v18 = vld [vmem:[%s17] sm:$0x1]
    %s19 = scalar_lea.vmem %s0, 126
    %v20 = vld [vmem:[%s19] sm:$0x2]
    %vm21 = vcmask 1041409
    %v22 = vsel %vm21, %v20, %v18
    %s23 = scalar_lea.vmem %s0, 189
    %v24 = vld [vmem:[%s23] sm:$0x4]
    %vm25 = vcmask 1042434
    %v26 = vsel %vm25, %v24, %v22
    %s27 = scalar_lea.vmem %s0, 252
    %v28 = vld [vmem:[%s27] sm:$0x8]
    %vm29 = vcmask 1043459
    %v30 = vsel %vm29, %v28, %v26
    %31 = vrot.lane.b32.xlu0 %v30, 126
    %v32 = vpop.permute.xlu0 %31
    %vm33 = vcmask 1048560
    %34 = vst.msk [vmem:[#allocation0] ss:$8 sm:$0xf] %vm33, %v32
    %s35 = scalar_lea.vmem %s0, 62
    %v36 = vld [vmem:[%s35] sm:$0x1]
    %s37 = scalar_lea.vmem %s0, 125
    %v38 = vld [vmem:[%s37] sm:$0x2]
    %vm39 = vcmask 1041409
    %v40 = vsel %vm39, %v38, %v36
    %s41 = scalar_lea.vmem %s0, 188
    %v42 = vld [vmem:[%s41] sm:$0x4]
    %vm43 = vcmask 1042434
    %v44 = vsel %vm43, %v42, %v40
    %s45 = scalar_lea.vmem %s0, 251
    %v46 = vld [vmem:[%s45] sm:$0x8]
    %vm47 = vcmask 1043459
    %v48 = vsel %vm47, %v46, %v44
    %49 = vrot.lane.b32.xlu0 %v48, 124
    %v50 = vpop.permute.xlu0 %49
    %vm51 = vcmask 1032160
    %52 = vst.msk [vmem:[#allocation0] ss:$8 sm:$0xf] %vm51, %v50
    %s53 = scalar_lea.vmem %s0, 61
    %v54 = vld [vmem:[%s53] sm:$0x1]
    %s55 = scalar_lea.vmem %s0, 124
    %v56 = vld [vmem:[%s55] sm:$0x2]
    %vm57 = vcmask 1041409
    %v58 = vsel %vm57, %v56, %v54
    %s59 = scalar_lea.vmem %s0, 187
    %v60 = vld [vmem:[%s59] sm:$0x4]
    %vm61 = vcmask 1042434
    %v62 = vsel %vm61, %v60, %v58
    %s63 = scalar_lea.vmem %s0, 250
    %v64 = vld [vmem:[%s63] sm:$0x8]
    %vm65 = vcmask 1043459
    %v66 = vsel %vm65, %v64, %v62
    %67 = vrot.lane.b32.xlu0 %v66, 122
    %v68 = vpop.permute.xlu0 %67
    %vm69 = vcmask 1015760
    %70 = vst.msk [vmem:[#allocation0] ss:$8 sm:$0xf] %vm69, %v68
    %s71 = scalar_lea.vmem %s0, 60
    %v72 = vld [vmem:[%s71] sm:$0x1]
    %s73 = scalar_lea.vmem %s0, 123
    %v74 = vld [vmem:[%s73] sm:$0x2]
    %vm75 = vcmask 1041409
    %v76 = vsel %vm75, %v74, %v72
    %s77 = scalar_lea.vmem %s0, 186
    %v78 = vld [vmem:[%s77] sm:$0x4]
    %vm79 = vcmask 1042434
    %v80 = vsel %vm79, %v78, %v76
    %s81 = scalar_lea.vmem %s0, 249
    %v82 = vld [vmem:[%s81] sm:$0x8]
    %vm83 = vcmask 1043459
    %v84 = vsel %vm83, %v82, %v80
    %85 = vrot.lane.b32.xlu0 %v84, 120
    %v86 = vpop.permute.xlu0 %85
    %vm87 = vcmask 999360
    %88 = vst.msk [vmem:[#allocation0] ss:$8 sm:$0xf] %vm87, %v86
    %s89 = scalar_lea.vmem %s0, 59
    %v90 = vld [vmem:[%s89] sm:$0x1]
    %s91 = scalar_lea.vmem %s0, 122
    %v92 = vld [vmem:[%s91] sm:$0x2]
    %vm93 = vcmask 1041409
    %v94 = vsel %vm93, %v92, %v90
    %s95 = scalar_lea.vmem %s0, 185
    %v96 = vld [vmem:[%s95] sm:$0x4]
    %vm97 = vcmask 1042434
    %v98 = vsel %vm97, %v96, %v94
    %s99 = scalar_lea.vmem %s0, 248
    %v100 = vld [vmem:[%s99] sm:$0x8]
    %vm101 = vcmask 1043459
    %v102 = vsel %vm101, %v100, %v98
    %103 = vrot.lane.b32.xlu0 %v102, 118
    %v104 = vpop.permute.xlu0 %103
    %vm105 = vcmask 982960
    %106 = vst.msk [vmem:[#allocation0] ss:$8 sm:$0xf] %vm105, %v104
    %s107 = scalar_lea.vmem %s0, 58
    %v108 = vld [vmem:[%s107] sm:$0x1]
    %s109 = scalar_lea.vmem %s0, 121
    %v110 = vld [vmem:[%s109] sm:$0x2]
    %vm111 = vcmask 1041409
    %v112 = vsel %vm111, %v110, %v108
    %s113 = scalar_lea.vmem %s0, 184
    %v114 = vld [vmem:[%s113] sm:$0x4]
    %vm115 = vcmask 1042434
    %v116 = vsel %vm115, %v114, %v112
    %s117 = scalar_lea.vmem %s0, 247
    %v118 = vld [vmem:[%s117] sm:$0x8]
    %vm119 = vcmask 1043459
    %v120 = vsel %vm119, %v118, %v116
    %121 = vrot.lane.b32.xlu0 %v120, 116
    %v122 = vpop.permute.xlu0 %121
    %vm123 = vcmask 966560
    %124 = vst.msk [vmem:[#allocation0] ss:$8 sm:$0xf] %vm123, %v122
    %s125 = scalar_lea.vmem %s0, 57
    %v126 = vld [vmem:[%s125] sm:$0x1]
    %s127 = scalar_lea.vmem %s0, 120
    %v128 = vld [vmem:[%s127] sm:$0x2]
    %vm129 = vcmask 1041409
    %v130 = vsel %vm129, %v128, %v126
    %s131 = scalar_lea.vmem %s0, 183
    %v132 = vld [vmem:[%s131] sm:$0x4]
    %vm133 = vcmask 1042434
    %v134 = vsel %vm133, %v132, %v130
    %s135 = scalar_lea.vmem %s0, 246
    %v136 = vld [vmem:[%s135] sm:$0x8]
    %vm137 = vcmask 1043459
    %v138 = vsel %vm137, %v136, %v134
    %139 = vrot.lane.b32.xlu0 %v138, 114
    %v140 = vpop.permute.xlu0 %139
    %vm141 = vcmask 950160
    %142 = vst.msk [vmem:[#allocation0] ss:$8 sm:$0xf] %vm141, %v140
    %s143 = scalar_lea.vmem %s0, 56
    %v144 = vld [vmem:[%s143] sm:$0x1]
    %s145 = scalar_lea.vmem %s0, 119
    %v146 = vld [vmem:[%s145] sm:$0x2]
    %vm147 = vcmask 1041409
    %v148 = vsel %vm147, %v146, %v144
    %s149 = scalar_lea.vmem %s0, 182
    %v150 = vld [vmem:[%s149] sm:$0x4]
    %vm151 = vcmask 1042434
    %v152 = vsel %vm151, %v150, %v148
    %s153 = scalar_lea.vmem %s0, 245
    %v154 = vld [vmem:[%s153] sm:$0x8]
    %vm155 = vcmask 1043459
    %v156 = vsel %vm155, %v154, %v152
    %157 = vrot.lane.b32.xlu0 %v156, 112
    %v158 = vpop.permute.xlu0 %157
    %vm159 = vcmask 933760
    %160 = vst.msk [vmem:[#allocation0] ss:$8 sm:$0xf] %vm159, %v158
    %s161 = scalar_lea.vmem %s0, 55
    %v162 = vld [vmem:[%s161] sm:$0x1]
    %s163 = scalar_lea.vmem %s0, 118
    %v164 = vld [vmem:[%s163] sm:$0x2]
    %vm165 = vcmask 1041409
    %v166 = vsel %vm165, %v164, %v162
    %s167 = scalar_lea.vmem %s0, 181
    %v168 = vld [vmem:[%s167] sm:$0x4]
    %vm169 = vcmask 1042434
    %v170 = vsel %vm169, %v168, %v166
    %s171 = scalar_lea.vmem %s0, 244
    %v172 = vld [vmem:[%s171] sm:$0x8]
    %vm173 = vcmask 1043459
    %v174 = vsel %vm173, %v172, %v170
    %175 = vrot.lane.b32.xlu0 %v174, 110
    %v176 = vpop.permute.xlu0 %175
    %vm177 = vcmask 917360
    %178 = vst.msk [vmem:[#allocation0] ss:$8 sm:$0xf] %vm177, %v176
    %s179 = scalar_lea.vmem %s0, 54
    %v180 = vld [vmem:[%s179] sm:$0x1]
    %s181 = scalar_lea.vmem %s0, 117
    %v182 = vld [vmem:[%s181] sm:$0x2]
    %vm183 = vcmask 1041409
    %v184 = vsel %vm183, %v182, %v180
    %s185 = scalar_lea.vmem %s0, 180
    %v186 = vld [vmem:[%s185] sm:$0x4]
    %vm187 = vcmask 1042434
    %v188 = vsel %vm187, %v186, %v184
    %s189 = scalar_lea.vmem %s0, 243
    %v190 = vld [vmem:[%s189] sm:$0x8]
    %vm191 = vcmask 1043459
    %v192 = vsel %vm191, %v190, %v188
    %193 = vrot.lane.b32.xlu0 %v192, 108
    %v194 = vpop.permute.xlu0 %193
    %vm195 = vcmask 900960
    %196 = vst.msk [vmem:[#allocation0] ss:$8 sm:$0xf] %vm195, %v194
    %s197 = scalar_lea.vmem %s0, 53
    %v198 = vld [vmem:[%s197] sm:$0x1]
    %s199 = scalar_lea.vmem %s0, 116
    %v200 = vld [vmem:[%s199] sm:$0x2]
    %vm201 = vcmask 1041409
    %v202 = vsel %vm201, %v200, %v198
    %s203 = scalar_lea.vmem %s0, 179
    %v204 = vld [vmem:[%s203] sm:$0x4]
    %vm205 = vcmask 1042434
    %v206 = vsel %vm205, %v204, %v202
    %s207 = scalar_lea.vmem %s0, 242
    %v208 = vld [vmem:[%s207] sm:$0x8]
    %vm209 = vcmask 1043459
    %v210 = vsel %vm209, %v208, %v206
    %211 = vrot.lane.b32.xlu0 %v210, 106
    %v212 = vpop.permute.xlu0 %211
    %vm213 = vcmask 884560
    %214 = vst.msk [vmem:[#allocation0] ss:$8 sm:$0xf] %vm213, %v212
    %s215 = scalar_lea.vmem %s0, 52
    %v216 = vld [vmem:[%s215] sm:$0x1]
    %s217 = scalar_lea.vmem %s0, 115
    %v218 = vld [vmem:[%s217] sm:$0x2]
    %vm219 = vcmask 1041409
    %v220 = vsel %vm219, %v218, %v216
    %s221 = scalar_lea.vmem %s0, 178
    %v222 = vld [vmem:[%s221] sm:$0x4]
    %vm223 = vcmask 1042434
    %v224 = vsel %vm223, %v222, %v220
    %s225 = scalar_lea.vmem %s0, 241
    %v226 = vld [vmem:[%s225] sm:$0x8]
    %vm227 = vcmask 1043459
    %v228 = vsel %vm227, %v226, %v224
    %229 = vrot.lane.b32.xlu0 %v228, 104
    %v230 = vpop.permute.xlu0 %229
    %vm231 = vcmask 868160
    %232 = vst.msk [vmem:[#allocation0] ss:$8 sm:$0xf] %vm231, %v230
    %s233 = scalar_lea.vmem %s0, 51
    %v234 = vld [vmem:[%s233] sm:$0x1]
    %s235 = scalar_lea.vmem %s0, 114
    %v236 = vld [vmem:[%s235] sm:$0x2]
    %vm237 = vcmask 1041409
    %v238 = vsel %vm237, %v236, %v234
    %s239 = scalar_lea.vmem %s0, 177
    %v240 = vld [vmem:[%s239] sm:$0x4]
    %vm241 = vcmask 1042434
    %v242 = vsel %vm241, %v240, %v238
    %s243 = scalar_lea.vmem %s0, 240
    %v244 = vld [vmem:[%s243] sm:$0x8]
    %vm245 = vcmask 1043459
    %v246 = vsel %vm245, %v244, %v242
    %247 = vrot.lane.b32.xlu0 %v246, 102
    %v248 = vpop.permute.xlu0 %247
    %vm249 = vcmask 851760
    %250 = vst.msk [vmem:[#allocation0] ss:$8 sm:$0xf] %vm249, %v248
    %s251 = scalar_lea.vmem %s0, 50
    %v252 = vld [vmem:[%s251] sm:$0x1]
    %s253 = scalar_lea.vmem %s0, 113
    %v254 = vld [vmem:[%s253] sm:$0x2]
    %vm255 = vcmask 1041409
    %v256 = vsel %vm255, %v254, %v252
    %s257 = scalar_lea.vmem %s0, 176
    %v258 = vld [vmem:[%s257] sm:$0x4]
    %vm259 = vcmask 1042434
    %v260 = vsel %vm259, %v258, %v256
    %s261 = scalar_lea.vmem %s0, 239
    %v262 = vld [vmem:[%s261] sm:$0x8]
    %vm263 = vcmask 1043459
    %v264 = vsel %vm263, %v262, %v260
    %265 = vrot.lane.b32.xlu0 %v264, 100
    %v266 = vpop.permute.xlu0 %265
    %vm267 = vcmask 835360
    %268 = vst.msk [vmem:[#allocation0] ss:$8 sm:$0xf] %vm267, %v266
    %s269 = scalar_lea.vmem %s0, 49
    %v270 = vld [vmem:[%s269] sm:$0x1]
    %s271 = scalar_lea.vmem %s0, 112
    %v272 = vld [vmem:[%s271] sm:$0x2]
    %vm273 = vcmask 1041409
    %v274 = vsel %vm273, %v272, %v270
    %s275 = scalar_lea.vmem %s0, 175
    %v276 = vld [vmem:[%s275] sm:$0x4]
    %vm277 = vcmask 1042434
    %v278 = vsel %vm277, %v276, %v274
    %s279 = scalar_lea.vmem %s0, 238
    %v280 = vld [vmem:[%s279] sm:$0x8]
    %vm281 = vcmask 1043459
    %v282 = vsel %vm281, %v280, %v278
    %283 = vrot.lane.b32.xlu0 %v282, 98
    %v284 = vpop.permute.xlu0 %283
    %vm285 = vcmask 818960
    %286 = vst.msk [vmem:[#allocation0] ss:$8 sm:$0xf] %vm285, %v284
    %s287 = scalar_lea.vmem %s0, 48
    %v288 = vld [vmem:[%s287] sm:$0x1]
    %s289 = scalar_lea.vmem %s0, 111
    %v290 = vld [vmem:[%s289] sm:$0x2]
    %vm291 = vcmask 1041409
    %v292 = vsel %vm291, %v290, %v288
    %s293 = scalar_lea.vmem %s0, 174
    %v294 = vld [vmem:[%s293] sm:$0x4]
    %vm295 = vcmask 1042434
    %v296 = vsel %vm295, %v294, %v292
    %s297 = scalar_lea.vmem %s0, 237
    %v298 = vld [vmem:[%s297] sm:$0x8]
    %vm299 = vcmask 1043459
    %v300 = vsel %vm299, %v298, %v296
    %301 = vrot.lane.b32.xlu0 %v300, 96
    %v302 = vpop.permute.xlu0 %301
    %vm303 = vcmask 802560
    %304 = vst.msk [vmem:[#allocation0] ss:$8 sm:$0xf] %vm303, %v302
    %s305 = scalar_lea.vmem %s0, 47
    %v306 = vld [vmem:[%s305] sm:$0x1]
    %s307 = scalar_lea.vmem %s0, 110
    %v308 = vld [vmem:[%s307] sm:$0x2]
    %vm309 = vcmask 1041409
    %v310 = vsel %vm309, %v308, %v306
    %s311 = scalar_lea.vmem %s0, 173
    %v312 = vld [vmem:[%s311] sm:$0x4]
    %vm313 = vcmask 1042434
    %v314 = vsel %vm313, %v312, %v310
    %s315 = scalar_lea.vmem %s0, 236
    %v316 = vld [vmem:[%s315] sm:$0x8]
    %vm317 = vcmask 1043459
    %v318 = vsel %vm317, %v316, %v314
    %319 = vrot.lane.b32.xlu0 %v318, 94
    %v320 = vpop.permute.xlu0 %319
    %vm321 = vcmask 786160
    %322 = vst.msk [vmem:[#allocation0] ss:$8 sm:$0xf] %vm321, %v320
    %s323 = scalar_lea.vmem %s0, 46
    %v324 = vld [vmem:[%s323] sm:$0x1]
    %s325 = scalar_lea.vmem %s0, 109
    %v326 = vld [vmem:[%s325] sm:$0x2]
    %vm327 = vcmask 1041409
    %v328 = vsel %vm327, %v326, %v324
    %s329 = scalar_lea.vmem %s0, 172
    %v330 = vld [vmem:[%s329] sm:$0x4]
    %vm331 = vcmask 1042434
    %v332 = vsel %vm331, %v330, %v328
    %s333 = scalar_lea.vmem %s0, 235
    %v334 = vld [vmem:[%s333] sm:$0x8]
    %vm335 = vcmask 1043459
    %v336 = vsel %vm335, %v334, %v332
    %337 = vrot.lane.b32.xlu0 %v336, 92
    %v338 = vpop.permute.xlu0 %337
    %vm339 = vcmask 769760
    %340 = vst.msk [vmem:[#allocation0] ss:$8 sm:$0xf] %vm339, %v338
    %s341 = scalar_lea.vmem %s0, 45
    %v342 = vld [vmem:[%s341] sm:$0x1]
    %s343 = scalar_lea.vmem %s0, 108
    %v344 = vld [vmem:[%s343] sm:$0x2]
    %vm345 = vcmask 1041409
    %v346 = vsel %vm345, %v344, %v342
    %s347 = scalar_lea.vmem %s0, 171
    %v348 = vld [vmem:[%s347] sm:$0x4]
    %vm349 = vcmask 1042434
    %v350 = vsel %vm349, %v348, %v346
    %s351 = scalar_lea.vmem %s0, 234
    %v352 = vld [vmem:[%s351] sm:$0x8]
    %vm353 = vcmask 1043459
    %v354 = vsel %vm353, %v352, %v350
    %355 = vrot.lane.b32.xlu0 %v354, 90
    %v356 = vpop.permute.xlu0 %355
    %vm357 = vcmask 753360
    %358 = vst.msk [vmem:[#allocation0] ss:$8 sm:$0xf] %vm357, %v356
    %s359 = scalar_lea.vmem %s0, 44
    %v360 = vld [vmem:[%s359] sm:$0x1]
    %s361 = scalar_lea.vmem %s0, 107
    %v362 = vld [vmem:[%s361] sm:$0x2]
    %vm363 = vcmask 1041409
    %v364 = vsel %vm363, %v362, %v360
    %s365 = scalar_lea.vmem %s0, 170
    %v366 = vld [vmem:[%s365] sm:$0x4]
    %vm367 = vcmask 1042434
    %v368 = vsel %vm367, %v366, %v364
    %s369 = scalar_lea.vmem %s0, 233
    %v370 = vld [vmem:[%s369] sm:$0x8]
    %vm371 = vcmask 1043459
    %v372 = vsel %vm371, %v370, %v368
    %373 = vrot.lane.b32.xlu0 %v372, 88
    %v374 = vpop.permute.xlu0 %373
    %vm375 = vcmask 736960
    %376 = vst.msk [vmem:[#allocation0] ss:$8 sm:$0xf] %vm375, %v374
    %s377 = scalar_lea.vmem %s0, 43
    %v378 = vld [vmem:[%s377] sm:$0x1]
    %s379 = scalar_lea.vmem %s0, 106
    %v380 = vld [vmem:[%s379] sm:$0x2]
    %vm381 = vcmask 1041409
    %v382 = vsel %vm381, %v380, %v378
    %s383 = scalar_lea.vmem %s0, 169
    %v384 = vld [vmem:[%s383] sm:$0x4]
    %vm385 = vcmask 1042434
    %v386 = vsel %vm385, %v384, %v382
    %s387 = scalar_lea.vmem %s0, 232
    %v388 = vld [vmem:[%s387] sm:$0x8]
    %vm389 = vcmask 1043459
    %v390 = vsel %vm389, %v388, %v386
    %391 = vrot.lane.b32.xlu0 %v390, 86
    %v392 = vpop.permute.xlu0 %391
    %vm393 = vcmask 720560
    %394 = vst.msk [vmem:[#allocation0] ss:$8 sm:$0xf] %vm393, %v392
    %s395 = scalar_lea.vmem %s0, 42
    %v396 = vld [vmem:[%s395] sm:$0x1]
    %s397 = scalar_lea.vmem %s0, 105
    %v398 = vld [vmem:[%s397] sm:$0x2]
    %vm399 = vcmask 1041409
    %v400 = vsel %vm399, %v398, %v396
    %s401 = scalar_lea.vmem %s0, 168
    %v402 = vld [vmem:[%s401] sm:$0x4]
    %vm403 = vcmask 1042434
    %v404 = vsel %vm403, %v402, %v400
    %s405 = scalar_lea.vmem %s0, 231
    %v406 = vld [vmem:[%s405] sm:$0x8]
    %vm407 = vcmask 1043459
    %v408 = vsel %vm407, %v406, %v404
    %409 = vrot.lane.b32.xlu0 %v408, 84
    %v410 = vpop.permute.xlu0 %409
    %vm411 = vcmask 704160
    %412 = vst.msk [vmem:[#allocation0] ss:$8 sm:$0xf] %vm411, %v410
    %s413 = scalar_lea.vmem %s0, 41
    %v414 = vld [vmem:[%s413] sm:$0x1]
    %s415 = scalar_lea.vmem %s0, 104
    %v416 = vld [vmem:[%s415] sm:$0x2]
    %vm417 = vcmask 1041409
    %v418 = vsel %vm417, %v416, %v414
    %s419 = scalar_lea.vmem %s0, 167
    %v420 = vld [vmem:[%s419] sm:$0x4]
    %vm421 = vcmask 1042434
    %v422 = vsel %vm421, %v420, %v418
    %s423 = scalar_lea.vmem %s0, 230
    %v424 = vld [vmem:[%s423] sm:$0x8]
    %vm425 = vcmask 1043459
    %v426 = vsel %vm425, %v424, %v422
    %427 = vrot.lane.b32.xlu0 %v426, 82
    %v428 = vpop.permute.xlu0 %427
    %vm429 = vcmask 687760
    %430 = vst.msk [vmem:[#allocation0] ss:$8 sm:$0xf] %vm429, %v428
    %s431 = scalar_lea.vmem %s0, 40
    %v432 = vld [vmem:[%s431] sm:$0x1]
    %s433 = scalar_lea.vmem %s0, 103
    %v434 = vld [vmem:[%s433] sm:$0x2]
    %vm435 = vcmask 1041409
    %v436 = vsel %vm435, %v434, %v432
    %s437 = scalar_lea.vmem %s0, 166
    %v438 = vld [vmem:[%s437] sm:$0x4]
    %vm439 = vcmask 1042434
    %v440 = vsel %vm439, %v438, %v436
    %s441 = scalar_lea.vmem %s0, 229
    %v442 = vld [vmem:[%s441] sm:$0x8]
    %vm443 = vcmask 1043459
    %v444 = vsel %vm443, %v442, %v440
    %445 = vrot.lane.b32.xlu0 %v444, 80
    %v446 = vpop.permute.xlu0 %445
    %vm447 = vcmask 671360
    %448 = vst.msk [vmem:[#allocation0] ss:$8 sm:$0xf] %vm447, %v446
    %s449 = scalar_lea.vmem %s0, 39
    %v450 = vld [vmem:[%s449] sm:$0x1]
    %s451 = scalar_lea.vmem %s0, 102
    %v452 = vld [vmem:[%s451] sm:$0x2]
    %vm453 = vcmask 1041409
    %v454 = vsel %vm453, %v452, %v450
    %s455 = scalar_lea.vmem %s0, 165
    %v456 = vld [vmem:[%s455] sm:$0x4]
    %vm457 = vcmask 1042434
    %v458 = vsel %vm457, %v456, %v454
    %s459 = scalar_lea.vmem %s0, 228
    %v460 = vld [vmem:[%s459] sm:$0x8]
    %vm461 = vcmask 1043459
    %v462 = vsel %vm461, %v460, %v458
    %463 = vrot.lane.b32.xlu0 %v462, 78
    %v464 = vpop.permute.xlu0 %463
    %vm465 = vcmask 654960
    %466 = vst.msk [vmem:[#allocation0] ss:$8 sm:$0xf] %vm465, %v464
    %s467 = scalar_lea.vmem %s0, 38
    %v468 = vld [vmem:[%s467] sm:$0x1]
    %s469 = scalar_lea.vmem %s0, 101
    %v470 = vld [vmem:[%s469] sm:$0x2]
    %vm471 = vcmask 1041409
    %v472 = vsel %vm471, %v470, %v468
    %s473 = scalar_lea.vmem %s0, 164
    %v474 = vld [vmem:[%s473] sm:$0x4]
    %vm475 = vcmask 1042434
    %v476 = vsel %vm475, %v474, %v472
    %s477 = scalar_lea.vmem %s0, 227
    %v478 = vld [vmem:[%s477] sm:$0x8]
    %vm479 = vcmask 1043459
    %v480 = vsel %vm479, %v478, %v476
    %481 = vrot.lane.b32.xlu0 %v480, 76
    %v482 = vpop.permute.xlu0 %481
    %vm483 = vcmask 638560
    %484 = vst.msk [vmem:[#allocation0] ss:$8 sm:$0xf] %vm483, %v482
    %s485 = scalar_lea.vmem %s0, 37
    %v486 = vld [vmem:[%s485] sm:$0x1]
    %s487 = scalar_lea.vmem %s0, 100
    %v488 = vld [vmem:[%s487] sm:$0x2]
    %vm489 = vcmask 1041409
    %v490 = vsel %vm489, %v488, %v486
    %s491 = scalar_lea.vmem %s0, 163
    %v492 = vld [vmem:[%s491] sm:$0x4]
    %vm493 = vcmask 1042434
    %v494 = vsel %vm493, %v492, %v490
    %s495 = scalar_lea.vmem %s0, 226
    %v496 = vld [vmem:[%s495] sm:$0x8]
    %vm497 = vcmask 1043459
    %v498 = vsel %vm497, %v496, %v494
    %499 = vrot.lane.b32.xlu0 %v498, 74
    %v500 = vpop.permute.xlu0 %499
    %vm501 = vcmask 622160
    %502 = vst.msk [vmem:[#allocation0] ss:$8 sm:$0xf] %vm501, %v500
    %s503 = scalar_lea.vmem %s0, 36
    %v504 = vld [vmem:[%s503] sm:$0x1]
    %s505 = scalar_lea.vmem %s0, 99
    %v506 = vld [vmem:[%s505] sm:$0x2]
    %vm507 = vcmask 1041409
    %v508 = vsel %vm507, %v506, %v504
    %s509 = scalar_lea.vmem %s0, 162
    %v510 = vld [vmem:[%s509] sm:$0x4]
    %vm511 = vcmask 1042434
    %v512 = vsel %vm511, %v510, %v508
    %s513 = scalar_lea.vmem %s0, 225
    %v514 = vld [vmem:[%s513] sm:$0x8]
    %vm515 = vcmask 1043459
    %v516 = vsel %vm515, %v514, %v512
    %517 = vrot.lane.b32.xlu0 %v516, 72
    %v518 = vpop.permute.xlu0 %517
    %vm519 = vcmask 605760
    %520 = vst.msk [vmem:[#allocation0] ss:$8 sm:$0xf] %vm519, %v518
    %s521 = scalar_lea.vmem %s0, 35
    %v522 = vld [vmem:[%s521] sm:$0x1]
    %s523 = scalar_lea.vmem %s0, 98
    %v524 = vld [vmem:[%s523] sm:$0x2]
    %vm525 = vcmask 1041409
    %v526 = vsel %vm525, %v524, %v522
    %s527 = scalar_lea.vmem %s0, 161
    %v528 = vld [vmem:[%s527] sm:$0x4]
    %vm529 = vcmask 1042434
    %v530 = vsel %vm529, %v528, %v526
    %s531 = scalar_lea.vmem %s0, 224
    %v532 = vld [vmem:[%s531] sm:$0x8]
    %vm533 = vcmask 1043459
    %v534 = vsel %vm533, %v532, %v530
    %535 = vrot.lane.b32.xlu0 %v534, 70
    %v536 = vpop.permute.xlu0 %535
    %vm537 = vcmask 589360
    %538 = vst.msk [vmem:[#allocation0] ss:$8 sm:$0xf] %vm537, %v536
    %s539 = scalar_lea.vmem %s0, 34
    %v540 = vld [vmem:[%s539] sm:$0x1]
    %s541 = scalar_lea.vmem %s0, 97
    %v542 = vld [vmem:[%s541] sm:$0x2]
    %vm543 = vcmask 1041409
    %v544 = vsel %vm543, %v542, %v540
    %s545 = scalar_lea.vmem %s0, 160
    %v546 = vld [vmem:[%s545] sm:$0x4]
    %vm547 = vcmask 1042434
    %v548 = vsel %vm547, %v546, %v544
    %s549 = scalar_lea.vmem %s0, 223
    %v550 = vld [vmem:[%s549] sm:$0x8]
    %vm551 = vcmask 1043459
    %v552 = vsel %vm551, %v550, %v548
    %553 = vrot.lane.b32.xlu0 %v552, 68
    %v554 = vpop.permute.xlu0 %553
    %vm555 = vcmask 572960
    %556 = vst.msk [vmem:[#allocation0] ss:$8 sm:$0xf] %vm555, %v554
    %s557 = scalar_lea.vmem %s0, 33
    %v558 = vld [vmem:[%s557] sm:$0x1]
    %s559 = scalar_lea.vmem %s0, 96
    %v560 = vld [vmem:[%s559] sm:$0x2]
    %vm561 = vcmask 1041409
    %v562 = vsel %vm561, %v560, %v558
    %s563 = scalar_lea.vmem %s0, 159
    %v564 = vld [vmem:[%s563] sm:$0x4]
    %vm565 = vcmask 1042434
    %v566 = vsel %vm565, %v564, %v562
    %s567 = scalar_lea.vmem %s0, 222
    %v568 = vld [vmem:[%s567] sm:$0x8]
    %vm569 = vcmask 1043459
    %v570 = vsel %vm569, %v568, %v566
    %571 = vrot.lane.b32.xlu0 %v570, 66
    %v572 = vpop.permute.xlu0 %571
    %vm573 = vcmask 556560
    %574 = vst.msk [vmem:[#allocation0] ss:$8 sm:$0xf] %vm573, %v572
    %s575 = scalar_lea.vmem %s0, 32
    %v576 = vld [vmem:[%s575] sm:$0x1]
    %s577 = scalar_lea.vmem %s0, 95
    %v578 = vld [vmem:[%s577] sm:$0x2]
    %vm579 = vcmask 1041409
    %v580 = vsel %vm579, %v578, %v576
    %s581 = scalar_lea.vmem %s0, 158
    %v582 = vld [vmem:[%s581] sm:$0x4]
    %vm583 = vcmask 1042434
    %v584 = vsel %vm583, %v582, %v580
    %s585 = scalar_lea.vmem %s0, 221
    %v586 = vld [vmem:[%s585] sm:$0x8]
    %vm587 = vcmask 1043459
    %v588 = vsel %vm587, %v586, %v584
    %589 = vrot.lane.b32.xlu0 %v588, 64
    %v590 = vpop.permute.xlu0 %589
    %vm591 = vcmask 540160
    %592 = vst.msk [vmem:[#allocation0] ss:$8 sm:$0xf] %vm591, %v590
    %s593 = scalar_lea.vmem %s0, 31
    %v594 = vld [vmem:[%s593] sm:$0x1]
    %s595 = scalar_lea.vmem %s0, 94
    %v596 = vld [vmem:[%s595] sm:$0x2]
    %vm597 = vcmask 1041409
    %v598 = vsel %vm597, %v596, %v594
    %s599 = scalar_lea.vmem %s0, 157
    %v600 = vld [vmem:[%s599] sm:$0x4]
    %vm601 = vcmask 1042434
    %v602 = vsel %vm601, %v600, %v598
    %s603 = scalar_lea.vmem %s0, 220
    %v604 = vld [vmem:[%s603] sm:$0x8]
    %vm605 = vcmask 1043459
    %v606 = vsel %vm605, %v604, %v602
    %607 = vrot.lane.b32.xlu0 %v606, 62
    %v608 = vpop.permute.xlu0 %607
    %vm609 = vcmask 523760
    %610 = vst.msk [vmem:[#allocation0] ss:$8 sm:$0xf] %vm609, %v608
    %s611 = scalar_lea.vmem %s0, 30
    %v612 = vld [vmem:[%s611] sm:$0x1]
    %s613 = scalar_lea.vmem %s0, 93
    %v614 = vld [vmem:[%s613] sm:$0x2]
    %vm615 = vcmask 1041409
    %v616 = vsel %vm615, %v614, %v612
    %s617 = scalar_lea.vmem %s0, 156
    %v618 = vld [vmem:[%s617] sm:$0x4]
    %vm619 = vcmask 1042434
    %v620 = vsel %vm619, %v618, %v616
    %s621 = scalar_lea.vmem %s0, 219
    %v622 = vld [vmem:[%s621] sm:$0x8]
    %vm623 = vcmask 1043459
    %v624 = vsel %vm623, %v622, %v620
    %625 = vrot.lane.b32.xlu0 %v624, 60
    %v626 = vpop.permute.xlu0 %625
    %vm627 = vcmask 507360
    %628 = vst.msk [vmem:[#allocation0] ss:$8 sm:$0xf] %vm627, %v626
    %s629 = scalar_lea.vmem %s0, 29
    %v630 = vld [vmem:[%s629] sm:$0x1]
    %s631 = scalar_lea.vmem %s0, 92
    %v632 = vld [vmem:[%s631] sm:$0x2]
    %vm633 = vcmask 1041409
    %v634 = vsel %vm633, %v632, %v630
    %s635 = scalar_lea.vmem %s0, 155
    %v636 = vld [vmem:[%s635] sm:$0x4]
    %vm637 = vcmask 1042434
    %v638 = vsel %vm637, %v636, %v634
    %s639 = scalar_lea.vmem %s0, 218
    %v640 = vld [vmem:[%s639] sm:$0x8]
    %vm641 = vcmask 1043459
    %v642 = vsel %vm641, %v640, %v638
    %643 = vrot.lane.b32.xlu0 %v642, 58
    %v644 = vpop.permute.xlu0 %643
    %vm645 = vcmask 490960
    %646 = vst.msk [vmem:[#allocation0] ss:$8 sm:$0xf] %vm645, %v644
    %s647 = scalar_lea.vmem %s0, 28
    %v648 = vld [vmem:[%s647] sm:$0x1]
    %s649 = scalar_lea.vmem %s0, 91
    %v650 = vld [vmem:[%s649] sm:$0x2]
    %vm651 = vcmask 1041409
    %v652 = vsel %vm651, %v650, %v648
    %s653 = scalar_lea.vmem %s0, 154
    %v654 = vld [vmem:[%s653] sm:$0x4]
    %vm655 = vcmask 1042434
    %v656 = vsel %vm655, %v654, %v652
    %s657 = scalar_lea.vmem %s0, 217
    %v658 = vld [vmem:[%s657] sm:$0x8]
    %vm659 = vcmask 1043459
    %v660 = vsel %vm659, %v658, %v656
    %661 = vrot.lane.b32.xlu0 %v660, 56
    %v662 = vpop.permute.xlu0 %661
    %vm663 = vcmask 474560
    %664 = vst.msk [vmem:[#allocation0] ss:$8 sm:$0xf] %vm663, %v662
    %s665 = scalar_lea.vmem %s0, 27
    %v666 = vld [vmem:[%s665] sm:$0x1]
    %s667 = scalar_lea.vmem %s0, 90
    %v668 = vld [vmem:[%s667] sm:$0x2]
    %vm669 = vcmask 1041409
    %v670 = vsel %vm669, %v668, %v666
    %s671 = scalar_lea.vmem %s0, 153
    %v672 = vld [vmem:[%s671] sm:$0x4]
    %vm673 = vcmask 1042434
    %v674 = vsel %vm673, %v672, %v670
    %s675 = scalar_lea.vmem %s0, 216
    %v676 = vld [vmem:[%s675] sm:$0x8]
    %vm677 = vcmask 1043459
    %v678 = vsel %vm677, %v676, %v674
    %679 = vrot.lane.b32.xlu0 %v678, 54
    %v680 = vpop.permute.xlu0 %679
    %vm681 = vcmask 458160
    %682 = vst.msk [vmem:[#allocation0] ss:$8 sm:$0xf] %vm681, %v680
    %s683 = scalar_lea.vmem %s0, 26
    %v684 = vld [vmem:[%s683] sm:$0x1]
    %s685 = scalar_lea.vmem %s0, 89
    %v686 = vld [vmem:[%s685] sm:$0x2]
    %vm687 = vcmask 1041409
    %v688 = vsel %vm687, %v686, %v684
    %s689 = scalar_lea.vmem %s0, 152
    %v690 = vld [vmem:[%s689] sm:$0x4]
    %vm691 = vcmask 1042434
    %v692 = vsel %vm691, %v690, %v688
    %s693 = scalar_lea.vmem %s0, 215
    %v694 = vld [vmem:[%s693] sm:$0x8]
    %vm695 = vcmask 1043459
    %v696 = vsel %vm695, %v694, %v692
    %697 = vrot.lane.b32.xlu0 %v696, 52
    %v698 = vpop.permute.xlu0 %697
    %vm699 = vcmask 441760
    %700 = vst.msk [vmem:[#allocation0] ss:$8 sm:$0xf] %vm699, %v698
    %s701 = scalar_lea.vmem %s0, 25
    %v702 = vld [vmem:[%s701] sm:$0x1]
    %s703 = scalar_lea.vmem %s0, 88
    %v704 = vld [vmem:[%s703] sm:$0x2]
    %vm705 = vcmask 1041409
    %v706 = vsel %vm705, %v704, %v702
    %s707 = scalar_lea.vmem %s0, 151
    %v708 = vld [vmem:[%s707] sm:$0x4]
    %vm709 = vcmask 1042434
    %v710 = vsel %vm709, %v708, %v706
    %s711 = scalar_lea.vmem %s0, 214
    %v712 = vld [vmem:[%s711] sm:$0x8]
    %vm713 = vcmask 1043459
    %v714 = vsel %vm713, %v712, %v710
    %715 = vrot.lane.b32.xlu0 %v714, 50
    %v716 = vpop.permute.xlu0 %715
    %vm717 = vcmask 425360
    %718 = vst.msk [vmem:[#allocation0] ss:$8 sm:$0xf] %vm717, %v716
    %s719 = scalar_lea.vmem %s0, 24
    %v720 = vld [vmem:[%s719] sm:$0x1]
    %s721 = scalar_lea.vmem %s0, 87
    %v722 = vld [vmem:[%s721] sm:$0x2]
    %vm723 = vcmask 1041409
    %v724 = vsel %vm723, %v722, %v720
    %s725 = scalar_lea.vmem %s0, 150
    %v726 = vld [vmem:[%s725] sm:$0x4]
    %vm727 = vcmask 1042434
    %v728 = vsel %vm727, %v726, %v724
    %s729 = scalar_lea.vmem %s0, 213
    %v730 = vld [vmem:[%s729] sm:$0x8]
    %vm731 = vcmask 1043459
    %v732 = vsel %vm731, %v730, %v728
    %733 = vrot.lane.b32.xlu0 %v732, 48
    %v734 = vpop.permute.xlu0 %733
    %vm735 = vcmask 408960
    %736 = vst.msk [vmem:[#allocation0] ss:$8 sm:$0xf] %vm735, %v734
    %s737 = scalar_lea.vmem %s0, 23
    %v738 = vld [vmem:[%s737] sm:$0x1]
    %s739 = scalar_lea.vmem %s0, 86
    %v740 = vld [vmem:[%s739] sm:$0x2]
    %vm741 = vcmask 1041409
    %v742 = vsel %vm741, %v740, %v738
    %s743 = scalar_lea.vmem %s0, 149
    %v744 = vld [vmem:[%s743] sm:$0x4]
    %vm745 = vcmask 1042434
    %v746 = vsel %vm745, %v744, %v742
    %s747 = scalar_lea.vmem %s0, 212
    %v748 = vld [vmem:[%s747] sm:$0x8]
    %vm749 = vcmask 1043459
    %v750 = vsel %vm749, %v748, %v746
    %751 = vrot.lane.b32.xlu0 %v750, 46
    %v752 = vpop.permute.xlu0 %751
    %vm753 = vcmask 392560
    %754 = vst.msk [vmem:[#allocation0] ss:$8 sm:$0xf] %vm753, %v752
    %s755 = scalar_lea.vmem %s0, 22
    %v756 = vld [vmem:[%s755] sm:$0x1]
    %s757 = scalar_lea.vmem %s0, 85
    %v758 = vld [vmem:[%s757] sm:$0x2]
    %vm759 = vcmask 1041409
    %v760 = vsel %vm759, %v758, %v756
    %s761 = scalar_lea.vmem %s0, 148
    %v762 = vld [vmem:[%s761] sm:$0x4]
    %vm763 = vcmask 1042434
    %v764 = vsel %vm763, %v762, %v760
    %s765 = scalar_lea.vmem %s0, 211
    %v766 = vld [vmem:[%s765] sm:$0x8]
    %vm767 = vcmask 1043459
    %v768 = vsel %vm767, %v766, %v764
    %769 = vrot.lane.b32.xlu0 %v768, 44
    %v770 = vpop.permute.xlu0 %769
    %vm771 = vcmask 376160
    %772 = vst.msk [vmem:[#allocation0] ss:$8 sm:$0xf] %vm771, %v770
    %s773 = scalar_lea.vmem %s0, 21
    %v774 = vld [vmem:[%s773] sm:$0x1]
    %s775 = scalar_lea.vmem %s0, 84
    %v776 = vld [vmem:[%s775] sm:$0x2]
    %vm777 = vcmask 1041409
    %v778 = vsel %vm777, %v776, %v774
    %s779 = scalar_lea.vmem %s0, 147
    %v780 = vld [vmem:[%s779] sm:$0x4]
    %vm781 = vcmask 1042434
    %v782 = vsel %vm781, %v780, %v778
    %s783 = scalar_lea.vmem %s0, 210
    %v784 = vld [vmem:[%s783] sm:$0x8]
    %vm785 = vcmask 1043459
    %v786 = vsel %vm785, %v784, %v782
    %787 = vrot.lane.b32.xlu0 %v786, 42
    %v788 = vpop.permute.xlu0 %787
    %vm789 = vcmask 359760
    %790 = vst.msk [vmem:[#allocation0] ss:$8 sm:$0xf] %vm789, %v788
    %s791 = scalar_lea.vmem %s0, 20
    %v792 = vld [vmem:[%s791] sm:$0x1]
    %s793 = scalar_lea.vmem %s0, 83
    %v794 = vld [vmem:[%s793] sm:$0x2]
    %vm795 = vcmask 1041409
    %v796 = vsel %vm795, %v794, %v792
    %s797 = scalar_lea.vmem %s0, 146
    %v798 = vld [vmem:[%s797] sm:$0x4]
    %vm799 = vcmask 1042434
    %v800 = vsel %vm799, %v798, %v796
    %s801 = scalar_lea.vmem %s0, 209
    %v802 = vld [vmem:[%s801] sm:$0x8]
    %vm803 = vcmask 1043459
    %v804 = vsel %vm803, %v802, %v800
    %805 = vrot.lane.b32.xlu0 %v804, 40
    %v806 = vpop.permute.xlu0 %805
    %vm807 = vcmask 343360
    %808 = vst.msk [vmem:[#allocation0] ss:$8 sm:$0xf] %vm807, %v806
    %s809 = scalar_lea.vmem %s0, 19
    %v810 = vld [vmem:[%s809] sm:$0x1]
    %s811 = scalar_lea.vmem %s0, 82
    %v812 = vld [vmem:[%s811] sm:$0x2]
    %vm813 = vcmask 1041409
    %v814 = vsel %vm813, %v812, %v810
    %s815 = scalar_lea.vmem %s0, 145
    %v816 = vld [vmem:[%s815] sm:$0x4]
    %vm817 = vcmask 1042434
    %v818 = vsel %vm817, %v816, %v814
    %s819 = scalar_lea.vmem %s0, 208
    %v820 = vld [vmem:[%s819] sm:$0x8]
    %vm821 = vcmask 1043459
    %v822 = vsel %vm821, %v820, %v818
    %823 = vrot.lane.b32.xlu0 %v822, 38
    %v824 = vpop.permute.xlu0 %823
    %vm825 = vcmask 326960
    %826 = vst.msk [vmem:[#allocation0] ss:$8 sm:$0xf] %vm825, %v824
    %s827 = scalar_lea.vmem %s0, 18
    %v828 = vld [vmem:[%s827] sm:$0x1]
    %s829 = scalar_lea.vmem %s0, 81
    %v830 = vld [vmem:[%s829] sm:$0x2]
    %vm831 = vcmask 1041409
    %v832 = vsel %vm831, %v830, %v828
    %s833 = scalar_lea.vmem %s0, 144
    %v834 = vld [vmem:[%s833] sm:$0x4]
    %vm835 = vcmask 1042434
    %v836 = vsel %vm835, %v834, %v832
    %s837 = scalar_lea.vmem %s0, 207
    %v838 = vld [vmem:[%s837] sm:$0x8]
    %vm839 = vcmask 1043459
    %v840 = vsel %vm839, %v838, %v836
    %841 = vrot.lane.b32.xlu0 %v840, 36
    %v842 = vpop.permute.xlu0 %841
    %vm843 = vcmask 310560
    %844 = vst.msk [vmem:[#allocation0] ss:$8 sm:$0xf] %vm843, %v842
    %s845 = scalar_lea.vmem %s0, 17
    %v846 = vld [vmem:[%s845] sm:$0x1]
    %s847 = scalar_lea.vmem %s0, 80
    %v848 = vld [vmem:[%s847] sm:$0x2]
    %vm849 = vcmask 1041409
    %v850 = vsel %vm849, %v848, %v846
    %s851 = scalar_lea.vmem %s0, 143
    %v852 = vld [vmem:[%s851] sm:$0x4]
    %vm853 = vcmask 1042434
    %v854 = vsel %vm853, %v852, %v850
    %s855 = scalar_lea.vmem %s0, 206
    %v856 = vld [vmem:[%s855] sm:$0x8]
    %vm857 = vcmask 1043459
    %v858 = vsel %vm857, %v856, %v854
    %859 = vrot.lane.b32.xlu0 %v858, 34
    %v860 = vpop.permute.xlu0 %859
    %vm861 = vcmask 294160
    %862 = vst.msk [vmem:[#allocation0] ss:$8 sm:$0xf] %vm861, %v860
    %s863 = scalar_lea.vmem %s0, 16
    %v864 = vld [vmem:[%s863] sm:$0x1]
    %s865 = scalar_lea.vmem %s0, 79
    %v866 = vld [vmem:[%s865] sm:$0x2]
    %vm867 = vcmask 1041409
    %v868 = vsel %vm867, %v866, %v864
    %s869 = scalar_lea.vmem %s0, 142
    %v870 = vld [vmem:[%s869] sm:$0x4]
    %vm871 = vcmask 1042434
    %v872 = vsel %vm871, %v870, %v868
    %s873 = scalar_lea.vmem %s0, 205
    %v874 = vld [vmem:[%s873] sm:$0x8]
    %vm875 = vcmask 1043459
    %v876 = vsel %vm875, %v874, %v872
    %877 = vrot.lane.b32.xlu0 %v876, 32
    %v878 = vpop.permute.xlu0 %877
    %vm879 = vcmask 277760
    %880 = vst.msk [vmem:[#allocation0] ss:$8 sm:$0xf] %vm879, %v878
    %s881 = scalar_lea.vmem %s0, 15
    %v882 = vld [vmem:[%s881] sm:$0x1]
    %s883 = scalar_lea.vmem %s0, 78
    %v884 = vld [vmem:[%s883] sm:$0x2]
    %vm885 = vcmask 1041409
    %v886 = vsel %vm885, %v884, %v882
    %s887 = scalar_lea.vmem %s0, 141
    %v888 = vld [vmem:[%s887] sm:$0x4]
    %vm889 = vcmask 1042434
    %v890 = vsel %vm889, %v888, %v886
    %s891 = scalar_lea.vmem %s0, 204
    %v892 = vld [vmem:[%s891] sm:$0x8]
    %vm893 = vcmask 1043459
    %v894 = vsel %vm893, %v892, %v890
    %895 = vrot.lane.b32.xlu0 %v894, 30
    %v896 = vpop.permute.xlu0 %895
    %vm897 = vcmask 261360
    %898 = vst.msk [vmem:[#allocation0] ss:$8 sm:$0xf] %vm897, %v896
    %s899 = scalar_lea.vmem %s0, 14
    %v900 = vld [vmem:[%s899] sm:$0x1]
    %s901 = scalar_lea.vmem %s0, 77
    %v902 = vld [vmem:[%s901] sm:$0x2]
    %vm903 = vcmask 1041409
    %v904 = vsel %vm903, %v902, %v900
    %s905 = scalar_lea.vmem %s0, 140
    %v906 = vld [vmem:[%s905] sm:$0x4]
    %vm907 = vcmask 1042434
    %v908 = vsel %vm907, %v906, %v904
    %s909 = scalar_lea.vmem %s0, 203
    %v910 = vld [vmem:[%s909] sm:$0x8]
    %vm911 = vcmask 1043459
    %v912 = vsel %vm911, %v910, %v908
    %913 = vrot.lane.b32.xlu0 %v912, 28
    %v914 = vpop.permute.xlu0 %913
    %vm915 = vcmask 244960
    %916 = vst.msk [vmem:[#allocation0] ss:$8 sm:$0xf] %vm915, %v914
    %s917 = scalar_lea.vmem %s0, 13
    %v918 = vld [vmem:[%s917] sm:$0x1]
    %s919 = scalar_lea.vmem %s0, 76
    %v920 = vld [vmem:[%s919] sm:$0x2]
    %vm921 = vcmask 1041409
    %v922 = vsel %vm921, %v920, %v918
    %s923 = scalar_lea.vmem %s0, 139
    %v924 = vld [vmem:[%s923] sm:$0x4]
    %vm925 = vcmask 1042434
    %v926 = vsel %vm925, %v924, %v922
    %s927 = scalar_lea.vmem %s0, 202
    %v928 = vld [vmem:[%s927] sm:$0x8]
    %vm929 = vcmask 1043459
    %v930 = vsel %vm929, %v928, %v926
    %931 = vrot.lane.b32.xlu0 %v930, 26
    %v932 = vpop.permute.xlu0 %931
    %vm933 = vcmask 228560
    %934 = vst.msk [vmem:[#allocation0] ss:$8 sm:$0xf] %vm933, %v932
    %s935 = scalar_lea.vmem %s0, 12
    %v936 = vld [vmem:[%s935] sm:$0x1]
    %s937 = scalar_lea.vmem %s0, 75
    %v938 = vld [vmem:[%s937] sm:$0x2]
    %vm939 = vcmask 1041409
    %v940 = vsel %vm939, %v938, %v936
    %s941 = scalar_lea.vmem %s0, 138
    %v942 = vld [vmem:[%s941] sm:$0x4]
    %vm943 = vcmask 1042434
    %v944 = vsel %vm943, %v942, %v940
    %s945 = scalar_lea.vmem %s0, 201
    %v946 = vld [vmem:[%s945] sm:$0x8]
    %vm947 = vcmask 1043459
    %v948 = vsel %vm947, %v946, %v944
    %949 = vrot.lane.b32.xlu0 %v948, 24
    %v950 = vpop.permute.xlu0 %949
    %vm951 = vcmask 212160
    %952 = vst.msk [vmem:[#allocation0] ss:$8 sm:$0xf] %vm951, %v950
    %s953 = scalar_lea.vmem %s0, 11
    %v954 = vld [vmem:[%s953] sm:$0x1]
    %s955 = scalar_lea.vmem %s0, 74
    %v956 = vld [vmem:[%s955] sm:$0x2]
    %vm957 = vcmask 1041409
    %v958 = vsel %vm957, %v956, %v954
    %s959 = scalar_lea.vmem %s0, 137
    %v960 = vld [vmem:[%s959] sm:$0x4]
    %vm961 = vcmask 1042434
    %v962 = vsel %vm961, %v960, %v958
    %s963 = scalar_lea.vmem %s0, 200
    %v964 = vld [vmem:[%s963] sm:$0x8]
    %vm965 = vcmask 1043459
    %v966 = vsel %vm965, %v964, %v962
    %967 = vrot.lane.b32.xlu0 %v966, 22
    %v968 = vpop.permute.xlu0 %967
    %vm969 = vcmask 195760
    %970 = vst.msk [vmem:[#allocation0] ss:$8 sm:$0xf] %vm969, %v968
    %s971 = scalar_lea.vmem %s0, 10
    %v972 = vld [vmem:[%s971] sm:$0x1]
    %s973 = scalar_lea.vmem %s0, 73
    %v974 = vld [vmem:[%s973] sm:$0x2]
    %vm975 = vcmask 1041409
    %v976 = vsel %vm975, %v974, %v972
    %s977 = scalar_lea.vmem %s0, 136
    %v978 = vld [vmem:[%s977] sm:$0x4]
    %vm979 = vcmask 1042434
    %v980 = vsel %vm979, %v978, %v976
    %s981 = scalar_lea.vmem %s0, 199
    %v982 = vld [vmem:[%s981] sm:$0x8]
    %vm983 = vcmask 1043459
    %v984 = vsel %vm983, %v982, %v980
    %985 = vrot.lane.b32.xlu0 %v984, 20
    %v986 = vpop.permute.xlu0 %985
    %vm987 = vcmask 179360
    %988 = vst.msk [vmem:[#allocation0] ss:$8 sm:$0xf] %vm987, %v986
    %s989 = scalar_lea.vmem %s0, 9
    %v990 = vld [vmem:[%s989] sm:$0x1]
    %s991 = scalar_lea.vmem %s0, 72
    %v992 = vld [vmem:[%s991] sm:$0x2]
    %vm993 = vcmask 1041409
    %v994 = vsel %vm993, %v992, %v990
    %s995 = scalar_lea.vmem %s0, 135
    %v996 = vld [vmem:[%s995] sm:$0x4]
    %vm997 = vcmask 1042434
    %v998 = vsel %vm997, %v996, %v994
    %s999 = scalar_lea.vmem %s0, 198
    %v1000 = vld [vmem:[%s999] sm:$0x8]
    %vm1001 = vcmask 1043459
    %v1002 = vsel %vm1001, %v1000, %v998
    %1003 = vrot.lane.b32.xlu0 %v1002, 18
    %v1004 = vpop.permute.xlu0 %1003
    %vm1005 = vcmask 162960
    %1006 = vst.msk [vmem:[#allocation0] ss:$8 sm:$0xf] %vm1005, %v1004
    %s1007 = scalar_lea.vmem %s0, 8
    %v1008 = vld [vmem:[%s1007] sm:$0x1]
    %s1009 = scalar_lea.vmem %s0, 71
    %v1010 = vld [vmem:[%s1009] sm:$0x2]
    %vm1011 = vcmask 1041409
    %v1012 = vsel %vm1011, %v1010, %v1008
    %s1013 = scalar_lea.vmem %s0, 134
    %v1014 = vld [vmem:[%s1013] sm:$0x4]
    %vm1015 = vcmask 1042434
    %v1016 = vsel %vm1015, %v1014, %v1012
    %s1017 = scalar_lea.vmem %s0, 197
    %v1018 = vld [vmem:[%s1017] sm:$0x8]
    %vm1019 = vcmask 1043459
    %v1020 = vsel %vm1019, %v1018, %v1016
    %1021 = vrot.lane.b32.xlu0 %v1020, 16
    %v1022 = vpop.permute.xlu0 %1021
    %vm1023 = vcmask 146560
    %1024 = vst.msk [vmem:[#allocation0] ss:$8 sm:$0xf] %vm1023, %v1022
    %s1025 = scalar_lea.vmem %s0, 7
    %v1026 = vld [vmem:[%s1025] sm:$0x1]
    %s1027 = scalar_lea.vmem %s0, 70
    %v1028 = vld [vmem:[%s1027] sm:$0x2]
    %vm1029 = vcmask 1041409
    %v1030 = vsel %vm1029, %v1028, %v1026
    %s1031 = scalar_lea.vmem %s0, 133
    %v1032 = vld [vmem:[%s1031] sm:$0x4]
    %vm1033 = vcmask 1042434
    %v1034 = vsel %vm1033, %v1032, %v1030
    %s1035 = scalar_lea.vmem %s0, 196
    %v1036 = vld [vmem:[%s1035] sm:$0x8]
    %vm1037 = vcmask 1043459
    %v1038 = vsel %vm1037, %v1036, %v1034
    %1039 = vrot.lane.b32.xlu0 %v1038, 14
    %v1040 = vpop.permute.xlu0 %1039
    %vm1041 = vcmask 130160
    %1042 = vst.msk [vmem:[#allocation0] ss:$8 sm:$0xf] %vm1041, %v1040
    %s1043 = scalar_lea.vmem %s0, 6
    %v1044 = vld [vmem:[%s1043] sm:$0x1]
    %s1045 = scalar_lea.vmem %s0, 69
    %v1046 = vld [vmem:[%s1045] sm:$0x2]
    %vm1047 = vcmask 1041409
    %v1048 = vsel %vm1047, %v1046, %v1044
    %s1049 = scalar_lea.vmem %s0, 132
    %v1050 = vld [vmem:[%s1049] sm:$0x4]
    %vm1051 = vcmask 1042434
    %v1052 = vsel %vm1051, %v1050, %v1048
    %s1053 = scalar_lea.vmem %s0, 195
    %v1054 = vld [vmem:[%s1053] sm:$0x8]
    %vm1055 = vcmask 1043459
    %v1056 = vsel %vm1055, %v1054, %v1052
    %1057 = vrot.lane.b32.xlu0 %v1056, 12
    %v1058 = vpop.permute.xlu0 %1057
    %vm1059 = vcmask 113760
    %1060 = vst.msk [vmem:[#allocation0] ss:$8 sm:$0xf] %vm1059, %v1058
    %s1061 = scalar_lea.vmem %s0, 5
    %v1062 = vld [vmem:[%s1061] sm:$0x1]
    %s1063 = scalar_lea.vmem %s0, 68
    %v1064 = vld [vmem:[%s1063] sm:$0x2]
    %vm1065 = vcmask 1041409
    %v1066 = vsel %vm1065, %v1064, %v1062
    %s1067 = scalar_lea.vmem %s0, 131
    %v1068 = vld [vmem:[%s1067] sm:$0x4]
    %vm1069 = vcmask 1042434
    %v1070 = vsel %vm1069, %v1068, %v1066
    %s1071 = scalar_lea.vmem %s0, 194
    %v1072 = vld [vmem:[%s1071] sm:$0x8]
    %vm1073 = vcmask 1043459
    %v1074 = vsel %vm1073, %v1072, %v1070
    %1075 = vrot.lane.b32.xlu0 %v1074, 10
    %v1076 = vpop.permute.xlu0 %1075
    %vm1077 = vcmask 97360
    %1078 = vst.msk [vmem:[#allocation0] ss:$8 sm:$0xf] %vm1077, %v1076
    %s1079 = scalar_lea.vmem %s0, 4
    %v1080 = vld [vmem:[%s1079] sm:$0x1]
    %s1081 = scalar_lea.vmem %s0, 67
    %v1082 = vld [vmem:[%s1081] sm:$0x2]
    %vm1083 = vcmask 1041409
    %v1084 = vsel %vm1083, %v1082, %v1080
    %s1085 = scalar_lea.vmem %s0, 130
    %v1086 = vld [vmem:[%s1085] sm:$0x4]
    %vm1087 = vcmask 1042434
    %v1088 = vsel %vm1087, %v1086, %v1084
    %s1089 = scalar_lea.vmem %s0, 193
    %v1090 = vld [vmem:[%s1089] sm:$0x8]
    %vm1091 = vcmask 1043459
    %v1092 = vsel %vm1091, %v1090, %v1088
    %1093 = vrot.lane.b32.xlu0 %v1092, 8
    %v1094 = vpop.permute.xlu0 %1093
    %vm1095 = vcmask 80960
    %1096 = vst.msk [vmem:[#allocation0] ss:$8 sm:$0xf] %vm1095, %v1094
    %s1097 = scalar_lea.vmem %s0, 3
    %v1098 = vld [vmem:[%s1097] sm:$0x1]
    %s1099 = scalar_lea.vmem %s0, 66
    %v1100 = vld [vmem:[%s1099] sm:$0x2]
    %vm1101 = vcmask 1041409
    %v1102 = vsel %vm1101, %v1100, %v1098
    %s1103 = scalar_lea.vmem %s0, 129
    %v1104 = vld [vmem:[%s1103] sm:$0x4]
    %vm1105 = vcmask 1042434
    %v1106 = vsel %vm1105, %v1104, %v1102
    %s1107 = scalar_lea.vmem %s0, 192
    %v1108 = vld [vmem:[%s1107] sm:$0x8]
    %vm1109 = vcmask 1043459
    %v1110 = vsel %vm1109, %v1108, %v1106
    %1111 = vrot.lane.b32.xlu0 %v1110, 6
    %v1112 = vpop.permute.xlu0 %1111
    %vm1113 = vcmask 64560
    %1114 = vst.msk [vmem:[#allocation0] ss:$8 sm:$0xf] %vm1113, %v1112
    %s1115 = scalar_lea.vmem %s0, 2
    %v1116 = vld [vmem:[%s1115] sm:$0x1]
    %s1117 = scalar_lea.vmem %s0, 65
    %v1118 = vld [vmem:[%s1117] sm:$0x2]
    %vm1119 = vcmask 1041409
    %v1120 = vsel %vm1119, %v1118, %v1116
    %s1121 = scalar_lea.vmem %s0, 128
    %v1122 = vld [vmem:[%s1121] sm:$0x4]
    %vm1123 = vcmask 1042434
    %v1124 = vsel %vm1123, %v1122, %v1120
    %s1125 = scalar_lea.vmem %s0, 191
    %v1126 = vld [vmem:[%s1125] sm:$0x8]
    %vm1127 = vcmask 1043459
    %v1128 = vsel %vm1127, %v1126, %v1124
    %1129 = vrot.lane.b32.xlu0 %v1128, 4
    %v1130 = vpop.permute.xlu0 %1129
    %vm1131 = vcmask 48160
    %1132 = vst.msk [vmem:[#allocation0] ss:$8 sm:$0xf] %vm1131, %v1130
    %s1133 = scalar_lea.vmem %s0, 1
    %v1134 = vld [vmem:[%s1133] sm:$0x1]
    %s1135 = scalar_lea.vmem %s0, 64
    %v1136 = vld [vmem:[%s1135] sm:$0x2]
    %vm1137 = vcmask 1041409
    %v1138 = vsel %vm1137, %v1136, %v1134
    %s1139 = scalar_lea.vmem %s0, 127
    %v1140 = vld [vmem:[%s1139] sm:$0x4]
    %vm1141 = vcmask 1042434
    %v1142 = vsel %vm1141, %v1140, %v1138
    %s1143 = scalar_lea.vmem %s0, 190
    %v1144 = vld [vmem:[%s1143] sm:$0x8]
    %vm1145 = vcmask 1043459
    %v1146 = vsel %vm1145, %v1144, %v1142
    %1147 = vrot.lane.b32.xlu0 %v1146, 2
    %v1148 = vpop.permute.xlu0 %1147
    %vm1149 = vcmask 31760
    %1150 = vst.msk [vmem:[#allocation0] ss:$8 sm:$0xf] %vm1149, %v1148
    %s1152 = sshll.u32 1, 1
    %s1153 = ssub.s32 %s1152, 1
    %v1155 = vld [vmem:[#allocation0] sm:%s1153]
    %s1156 = sshll.u32 1, 1
    %s1157 = ssub.s32 %s1156, 1
    %1158 = vst [vmem:[%s1] sm:%s1157] %v1155
    %s1159 = scalar_lea.vmem [#allocation0], 8
    %v1160 = vld [vmem:[%s1159] sm:%s1153]
    %s1161 = sshll.u32 1, 1
    %s1162 = ssub.s32 %s1161, 1
    %s1163 = scalar_lea.vmem %s1, 1
    %1164 = vst [vmem:[%s1163] sm:%s1162] %v1160
    %s1165 = scalar_lea.vmem [#allocation0], 16
    %v1166 = vld [vmem:[%s1165] sm:%s1153]
    %s1167 = sshll.u32 1, 1
    %s1168 = ssub.s32 %s1167, 1
    %s1169 = smul.addr 1, 2
    %s1170 = scalar_lea.vmem %s1, %s1169
    %1171 = vst [vmem:[%s1170] sm:%s1168] %v1166
    %s1172 = scalar_lea.vmem [#allocation0], 24
    %v1173 = vld [vmem:[%s1172] sm:%s1153]
    %s1174 = sshll.u32 1, 1
    %s1175 = ssub.s32 %s1174, 1
    %s1176 = smul.addr 1, 3
    %s1177 = scalar_lea.vmem %s1, %s1176
    %1178 = vst [vmem:[%s1177] sm:%s1175] %v1173

// kernel: model_forward.1
$region0: #{model_forward.1}
  #allocation0 [shape = 'u32[]', space=smem, size = 0x4, offset = 0x4, fixed_abs, tag = 'smem constant byte address 0x4 - core index']
  #allocation1 [shape = 'u32[144,128]{1,0:T(1,128)}', space=vmem, size = 0x12000, scoped, tag = 'internal scratch']
  %s0 = inlined_call_operand.vmem [shape: f32[8,128], index: 0, kind: input, shape index: {}]
  %s1 = inlined_call_operand.vmem [shape: f32[128,512], index: 1, kind: input, shape index: {}]
  %s2 = inlined_call_operand.vmem [shape: f32[1,512], index: 2, kind: input, shape index: {}]
  %s3 = inlined_call_operand.vmem [shape: f32[8,512], index: 3, kind: output, shape index: {}]
  %s4 = sld [smem:[#allocation0]]
  $region22: #{model_forward.1} parent=0
    _
  %s6 = ssub.s32 1, %s4
  %s7 = scalar_select 0, %s6, %s4
  // Predicated region
  $region2: #{model_forward.1} parent=0 // pred_check
    _
  $region3: #{model_forward.1} parent=0 // pred_check_branch
    %9 = sbr.rel (0) target = $region5
  $region4: #{model_forward.1} parent=0 // pred_region
    _
  $region5: #{model_forward.1} parent=0 // pred_fallthru
    _
  // Predicated region
  $region6: #{model_forward.1} parent=0 // pred_check
    _
  $region7: #{model_forward.1} parent=0 // pred_check_branch
    %11 = sbr.rel (0) target = $region9
  $region8: #{model_forward.1} parent=0 // pred_region
    _
  $region9: #{model_forward.1} parent=0 // pred_fallthru
    _
  // Predicated region
  $region10: #{model_forward.1} parent=0 // pred_check
    _
  $region11: #{model_forward.1} parent=0 // pred_check_branch
    %13 = sbr.rel (0) target = $region13
  $region12: #{model_forward.1} parent=0 // pred_region
    _
  $region13: #{model_forward.1} parent=0 // pred_fallthru
    _
  %v14 = vld [vmem:[%s0] sm:$0xff]
  %v15 = vld [vmem:[%s1] sm:$0xff]
  %v16 = vld [vmem:[%s1 + $0x8] sm:$0xff]
  %v17 = vld [vmem:[%s1 + $0x10] sm:$0xff]
  %v18 = vld [vmem:[%s1 + $0x18] sm:$0xff]
  %v19 = vld [vmem:[%s1 + $0x20] sm:$0xff]
  %v20 = vld [vmem:[%s1 + $0x28] sm:$0xff]
  %v21 = vld [vmem:[%s1 + $0x30] sm:$0xff]
  %v22 = vld [vmem:[%s1 + $0x38] sm:$0xff]
  %v23 = vld [vmem:[%s1 + $0x40] sm:$0xff]
  %v24 = vld [vmem:[%s1 + $0x48] sm:$0xff]
  %v25 = vld [vmem:[%s1 + $0x50] sm:$0xff]
  %v26 = vld [vmem:[%s1 + $0x58] sm:$0xff]
  %v27 = vld [vmem:[%s1 + $0x60] sm:$0xff]
  %v28 = vld [vmem:[%s1 + $0x68] sm:$0xff]
  %v29 = vld [vmem:[%s1 + $0x70] sm:$0xff]
  %v30 = vld [vmem:[%s1 + $0x78] sm:$0xff]
  %v31 = vld [vmem:[%s1 + $0x80] sm:$0xff]
  %v32 = vld [vmem:[%s1 + $0x88] sm:$0xff]
  %v33 = vld [vmem:[%s1 + $0x90] sm:$0xff]
  %v34 = vld [vmem:[%s1 + $0x98] sm:$0xff]
  %v35 = vld [vmem:[%s1 + $0xa0] sm:$0xff]
  %v36 = vld [vmem:[%s1 + $0xa8] sm:$0xff]
  %v37 = vld [vmem:[%s1 + $0xb0] sm:$0xff]
  %v38 = vld [vmem:[%s1 + $0xb8] sm:$0xff]
  %v39 = vld [vmem:[%s1 + $0xc0] sm:$0xff]
  %v40 = vld [vmem:[%s1 + $0xc8] sm:$0xff]
  %v41 = vld [vmem:[%s1 + $0xd0] sm:$0xff]
  %v42 = vld [vmem:[%s1 + $0xd8] sm:$0xff]
  %v43 = vld [vmem:[%s1 + $0xe0] sm:$0xff]
  %v44 = vld [vmem:[%s1 + $0xe8] sm:$0xff]
  %v45 = vld [vmem:[%s1 + $0xf0] sm:$0xff]
  %v46 = vld [vmem:[%s1 + $0xf8] sm:$0xff]
  %v47 = vld [vmem:[%s1 + $0x100] sm:$0xff]
  %v48 = vld [vmem:[%s1 + $0x108] sm:$0xff]
  %v49 = vld [vmem:[%s1 + $0x110] sm:$0xff]
  %v50 = vld [vmem:[%s1 + $0x118] sm:$0xff]
  %v51 = vld [vmem:[%s1 + $0x120] sm:$0xff]
  %v52 = vld [vmem:[%s1 + $0x128] sm:$0xff]
  %v53 = vld [vmem:[%s1 + $0x130] sm:$0xff]
  %v54 = vld [vmem:[%s1 + $0x138] sm:$0xff]
  %v55 = vld [vmem:[%s1 + $0x140] sm:$0xff]
  %v56 = vld [vmem:[%s1 + $0x148] sm:$0xff]
  %v57 = vld [vmem:[%s1 + $0x150] sm:$0xff]
  %v58 = vld [vmem:[%s1 + $0x158] sm:$0xff]
  %v59 = vld [vmem:[%s1 + $0x160] sm:$0xff]
  %v60 = vld [vmem:[%s1 + $0x168] sm:$0xff]
  %v61 = vld [vmem:[%s1 + $0x170] sm:$0xff]
  %v62 = vld [vmem:[%s1 + $0x178] sm:$0xff]
  %v63 = vld [vmem:[%s1 + $0x180] sm:$0xff]
  %v64 = vld [vmem:[%s1 + $0x188] sm:$0xff]
  %v65 = vld [vmem:[%s1 + $0x190] sm:$0xff]
  %v66 = vld [vmem:[%s1 + $0x198] sm:$0xff]
  %v67 = vld [vmem:[%s1 + $0x1a0] sm:$0xff]
  %v68 = vld [vmem:[%s1 + $0x1a8] sm:$0xff]
  %v69 = vld [vmem:[%s1 + $0x1b0] sm:$0xff]
  %v70 = vld [vmem:[%s1 + $0x1b8] sm:$0xff]
  %v71 = vld [vmem:[%s1 + $0x1c0] sm:$0xff]
  %v72 = vld [vmem:[%s1 + $0x1c8] sm:$0xff]
  %v73 = vld [vmem:[%s1 + $0x1d0] sm:$0xff]
  %v74 = vld [vmem:[%s1 + $0x1d8] sm:$0xff]
  %v75 = vld [vmem:[%s1 + $0x1e0] sm:$0xff]
  %v76 = vld [vmem:[%s1 + $0x1e8] sm:$0xff]
  %v77 = vld [vmem:[%s1 + $0x1f0] sm:$0xff]
  %v78 = vld [vmem:[%s1 + $0x1f8] sm:$0xff]
  %v79 = vld [vmem:[%s2] sm:$0xf]
  %v81 = vlaneseq
  %v82 = vshrl.u32 %v81, 7
  %v83 = vsub.s32 0, %v82
  %v84 = vrot.slane %v79, %v83
  %v85 = vlaneseq
  %v86 = vshrl.u32 %v85, 7
  %v87 = vsub.s32 1, %v86
  %v88 = vrot.slane %v79, %v87
  %v89 = vlaneseq
  %v90 = vshrl.u32 %v89, 7
  %v91 = vsub.s32 2, %v90
  %v92 = vrot.slane %v79, %v91
  %v93 = vlaneseq
  %v94 = vshrl.u32 %v93, 7
  %v95 = vsub.s32 3, %v94
  %v96 = vrot.slane %v79, %v95
  %v101 = vand.u32 %v76, 4294901760
  %102 = vmatprep.subr.mxu0 %v101
  %v103 = vand.u32 %v75, 4294901760
  %104 = vmatpush1.msra.mxu0 %v103
  %v105 = vand.u32 %v72, 4294901760
  %106 = vmatprep.subr.mxu0 %v105
  %v107 = vand.u32 %v71, 4294901760
  %108 = vmatpush1.msra.mxu0 %v107
  %v109 = vand.u32 %v68, 4294901760
  %110 = vmatprep.subr.mxu0 %v109
  %v111 = vand.u32 %v67, 4294901760
  %112 = vmatpush1.msra.mxu0 %v111
  %v113 = vand.u32 %v64, 4294901760
  %114 = vmatprep.subr.mxu0 %v113
  %v115 = vand.u32 %v63, 4294901760
  %116 = vmatpush1.msra.mxu0 %v115
  %v117 = vand.u32 %v60, 4294901760
  %118 = vmatprep.subr.mxu0 %v117
  %v119 = vand.u32 %v59, 4294901760
  %120 = vmatpush1.msra.mxu0 %v119
  %v121 = vand.u32 %v56, 4294901760
  %122 = vmatprep.subr.mxu0 %v121
  %v123 = vand.u32 %v55, 4294901760
  %124 = vmatpush1.msra.mxu0 %v123
  %v125 = vand.u32 %v52, 4294901760
  %126 = vmatprep.subr.mxu0 %v125
  %v127 = vand.u32 %v51, 4294901760
  %128 = vmatpush1.msra.mxu0 %v127
  %v129 = vand.u32 %v48, 4294901760
  %130 = vmatprep.subr.mxu0 %v129
  %v131 = vand.u32 %v47, 4294901760
  %132 = vmatpush1.msra.mxu0 %v131
  %v133 = vand.u32 %v44, 4294901760
  %134 = vmatprep.subr.mxu0 %v133
  %v135 = vand.u32 %v43, 4294901760
  %136 = vmatpush1.msra.mxu0 %v135
  %v137 = vand.u32 %v40, 4294901760
  %138 = vmatprep.subr.mxu0 %v137
  %v139 = vand.u32 %v39, 4294901760
  %140 = vmatpush1.msra.mxu0 %v139
  %v141 = vand.u32 %v36, 4294901760
  %142 = vmatprep.subr.mxu0 %v141
  %v143 = vand.u32 %v35, 4294901760
  %144 = vmatpush1.msra.mxu0 %v143
  %v145 = vand.u32 %v32, 4294901760
  %146 = vmatprep.subr.mxu0 %v145
  %v147 = vand.u32 %v31, 4294901760
  %148 = vmatpush1.msra.mxu0 %v147
  %v149 = vand.u32 %v28, 4294901760
  %150 = vmatprep.subr.mxu0 %v149
  %v151 = vand.u32 %v27, 4294901760
  %152 = vmatpush1.msra.mxu0 %v151
  %v153 = vand.u32 %v24, 4294901760
  %154 = vmatprep.subr.mxu0 %v153
  %v155 = vand.u32 %v23, 4294901760
  %156 = vmatpush1.msra.mxu0 %v155
  %v157 = vand.u32 %v20, 4294901760
  %158 = vmatprep.subr.mxu0 %v157
  %v159 = vand.u32 %v19, 4294901760
  %160 = vmatpush1.msra.mxu0 %v159
  %v161 = vand.u32 %v16, 4294901760
  %162 = vmatprep.subr.mxu0 %v161
  %v163 = vand.u32 %v15, 4294901760
  %164 = vmatpush1.msra.mxu0 %v163
  %165 = vmatprep.subr.mxu0 0.0
  %166 = vmatpush2.msra.mxu0 0.0
  %167 = vmatprep.subr.mxu0 0.0
  %168 = vmatpush2.msra.mxu0 0.0
  %169 = vmatprep.subr.mxu0 0.0
  %170 = vmatpush2.msra.mxu0 0.0
  %171 = vmatprep.subr.mxu0 0.0
  %172 = vmatpush2.msra.mxu0 0.0
  %173 = vmatprep.subr.mxu0 0.0
  %174 = vmatpush2.msra.mxu0 0.0
  %175 = vmatprep.subr.mxu0 0.0
  %176 = vmatpush2.msra.mxu0 0.0
  %177 = vmatprep.subr.mxu0 0.0
  %178 = vmatpush2.msra.mxu0 0.0
  %179 = vmatprep.subr.mxu0 0.0
  %180 = vmatpush2.msra.mxu0 0.0
  %181 = vmatprep.subr.mxu0 0.0
  %182 = vmatpush2.msra.mxu0 0.0
  %183 = vmatprep.subr.mxu0 0.0
  %184 = vmatpush2.msra.mxu0 0.0
  %185 = vmatprep.subr.mxu0 0.0
  %186 = vmatpush2.msra.mxu0 0.0
  %187 = vmatprep.subr.mxu0 0.0
  %188 = vmatpush2.msra.mxu0 0.0
  %189 = vmatprep.subr.mxu0 0.0
  %190 = vmatpush2.msra.mxu0 0.0
  %191 = vmatprep.subr.mxu0 0.0
  %192 = vmatpush2.msra.mxu0 0.0
  %193 = vmatprep.subr.mxu0 0.0
  %194 = vmatpush2.msra.mxu0 0.0
  %195 = vmatprep.subr.mxu0 0.0
  %196 = vmatpush2.msra.mxu0 0.0
  %197 = vmatprep.mubr.f32.mxu0 0.0
  %v198 = vand.u32 %v14, 4294901760
  %v199 = vsub.f32 %v14, %v198
  %v200 = vand.u32 %v199, 4294901760
  %v201 = vsub.f32 %v199, %v200
  %v202 = vand.u32 %v201, 4294901760
  %203 = vmatmul.mubr.f32.gmra.mxu0 %v202
  %v204 = vpop.f32.mrf.mxu0
  %v205 = vadd.f32 %v84, %v204
  %v206 = vpop.f32.mrf.mxu0
  %v207 = vadd.f32 %v88, %v206
  %208 = vdwg.mxu0
  %v209 = vand.u32 %v76, 4294901760
  %v210 = vsub.f32 %v76, %v209
  %v211 = vand.u32 %v210, 4294901760
  %v212 = vsub.f32 %v210, %v211
  %v213 = vand.u32 %v212, 4294901760
  %214 = vmatprep.subr.mxu0 %v213
  %v215 = vand.u32 %v75, 4294901760
  %v216 = vsub.f32 %v75, %v215
  %v217 = vand.u32 %v216, 4294901760
  %v218 = vsub.f32 %v216, %v217
  %v219 = vand.u32 %v218, 4294901760
  %220 = vmatpush1.msra.mxu0 %v219
  %v221 = vand.u32 %v72, 4294901760
  %v222 = vsub.f32 %v72, %v221
  %v223 = vand.u32 %v222, 4294901760
  %v224 = vsub.f32 %v222, %v223
  %v225 = vand.u32 %v224, 4294901760
  %226 = vmatprep.subr.mxu0 %v225
  %v227 = vand.u32 %v71, 4294901760
  %v228 = vsub.f32 %v71, %v227
  %v229 = vand.u32 %v228, 4294901760
  %v230 = vsub.f32 %v228, %v229
  %v231 = vand.u32 %v230, 4294901760
  %232 = vmatpush1.msra.mxu0 %v231
  %v233 = vand.u32 %v68, 4294901760
  %v234 = vsub.f32 %v68, %v233
  %v235 = vand.u32 %v234, 4294901760
  %v236 = vsub.f32 %v234, %v235
  %v237 = vand.u32 %v236, 4294901760
  %238 = vmatprep.subr.mxu0 %v237
  %v239 = vand.u32 %v67, 4294901760
  %v240 = vsub.f32 %v67, %v239
  %v241 = vand.u32 %v240, 4294901760
  %v242 = vsub.f32 %v240, %v241
  %v243 = vand.u32 %v242, 4294901760
  %244 = vmatpush1.msra.mxu0 %v243
  %v245 = vand.u32 %v64, 4294901760
  %v246 = vsub.f32 %v64, %v245
  %v247 = vand.u32 %v246, 4294901760
  %v248 = vsub.f32 %v246, %v247
  %v249 = vand.u32 %v248, 4294901760
  %250 = vmatprep.subr.mxu0 %v249
  %v251 = vand.u32 %v63, 4294901760
  %v252 = vsub.f32 %v63, %v251
  %v253 = vand.u32 %v252, 4294901760
  %v254 = vsub.f32 %v252, %v253
  %v255 = vand.u32 %v254, 4294901760
  %256 = vmatpush1.msra.mxu0 %v255
  %v257 = vand.u32 %v60, 4294901760
  %v258 = vsub.f32 %v60, %v257
  %v259 = vand.u32 %v258, 4294901760
  %v260 = vsub.f32 %v258, %v259
  %v261 = vand.u32 %v260, 4294901760
  %262 = vmatprep.subr.mxu0 %v261
  %v263 = vand.u32 %v59, 4294901760
  %v264 = vsub.f32 %v59, %v263
  %v265 = vand.u32 %v264, 4294901760
  %v266 = vsub.f32 %v264, %v265
  %v267 = vand.u32 %v266, 4294901760
  %268 = vmatpush1.msra.mxu0 %v267
  %v269 = vand.u32 %v56, 4294901760
  %v270 = vsub.f32 %v56, %v269
  %v271 = vand.u32 %v270, 4294901760
  %v272 = vsub.f32 %v270, %v271
  %v273 = vand.u32 %v272, 4294901760
  %274 = vmatprep.subr.mxu0 %v273
  %v275 = vand.u32 %v55, 4294901760
  %v276 = vsub.f32 %v55, %v275
  %v277 = vand.u32 %v276, 4294901760
  %v278 = vsub.f32 %v276, %v277
  %v279 = vand.u32 %v278, 4294901760
  %280 = vmatpush1.msra.mxu0 %v279
  %v281 = vand.u32 %v52, 4294901760
  %v282 = vsub.f32 %v52, %v281
  %v283 = vand.u32 %v282, 4294901760
  %v284 = vsub.f32 %v282, %v283
  %v285 = vand.u32 %v284, 4294901760
  %286 = vmatprep.subr.mxu0 %v285
  %v287 = vand.u32 %v51, 4294901760
  %v288 = vsub.f32 %v51, %v287
  %v289 = vand.u32 %v288, 4294901760
  %v290 = vsub.f32 %v288, %v289
  %v291 = vand.u32 %v290, 4294901760
  %292 = vmatpush1.msra.mxu0 %v291
  %v293 = vand.u32 %v48, 4294901760
  %v294 = vsub.f32 %v48, %v293
  %v295 = vand.u32 %v294, 4294901760
  %v296 = vsub.f32 %v294, %v295
  %v297 = vand.u32 %v296, 4294901760
  %298 = vmatprep.subr.mxu0 %v297
  %v299 = vand.u32 %v47, 4294901760
  %v300 = vsub.f32 %v47, %v299
  %v301 = vand.u32 %v300, 4294901760
  %v302 = vsub.f32 %v300, %v301
  %v303 = vand.u32 %v302, 4294901760
  %304 = vmatpush1.msra.mxu0 %v303
  %v305 = vand.u32 %v44, 4294901760
  %v306 = vsub.f32 %v44, %v305
  %v307 = vand.u32 %v306, 4294901760
  %v308 = vsub.f32 %v306, %v307
  %v309 = vand.u32 %v308, 4294901760
  %310 = vmatprep.subr.mxu0 %v309
  %v311 = vand.u32 %v43, 4294901760
  %v312 = vsub.f32 %v43, %v311
  %v313 = vand.u32 %v312, 4294901760
  %v314 = vsub.f32 %v312, %v313
  %v315 = vand.u32 %v314, 4294901760
  %316 = vmatpush1.msra.mxu0 %v315
  %v317 = vand.u32 %v40, 4294901760
  %v318 = vsub.f32 %v40, %v317
  %v319 = vand.u32 %v318, 4294901760
  %v320 = vsub.f32 %v318, %v319
  %v321 = vand.u32 %v320, 4294901760
  %322 = vmatprep.subr.mxu0 %v321
  %v323 = vand.u32 %v39, 4294901760
  %v324 = vsub.f32 %v39, %v323
  %v325 = vand.u32 %v324, 4294901760
  %v326 = vsub.f32 %v324, %v325
  %v327 = vand.u32 %v326, 4294901760
  %328 = vmatpush1.msra.mxu0 %v327
  %v329 = vand.u32 %v36, 4294901760
  %v330 = vsub.f32 %v36, %v329
  %v331 = vand.u32 %v330, 4294901760
  %v332 = vsub.f32 %v330, %v331
  %v333 = vand.u32 %v332, 4294901760
  %334 = vmatprep.subr.mxu0 %v333
  %v335 = vand.u32 %v35, 4294901760
  %v336 = vsub.f32 %v35, %v335
  %v337 = vand.u32 %v336, 4294901760
  %v338 = vsub.f32 %v336, %v337
  %v339 = vand.u32 %v338, 4294901760
  %340 = vmatpush1.msra.mxu0 %v339
  %v341 = vand.u32 %v32, 4294901760
  %v342 = vsub.f32 %v32, %v341
  %v343 = vand.u32 %v342, 4294901760
  %v344 = vsub.f32 %v342, %v343
  %v345 = vand.u32 %v344, 4294901760
  %346 = vmatprep.subr.mxu0 %v345
  %v347 = vand.u32 %v31, 4294901760
  %v348 = vsub.f32 %v31, %v347
  %v349 = vand.u32 %v348, 4294901760
  %v350 = vsub.f32 %v348, %v349
  %v351 = vand.u32 %v350, 4294901760
  %352 = vmatpush1.msra.mxu0 %v351
  %v353 = vand.u32 %v28, 4294901760
  %v354 = vsub.f32 %v28, %v353
  %v355 = vand.u32 %v354, 4294901760
  %v356 = vsub.f32 %v354, %v355
  %v357 = vand.u32 %v356, 4294901760
  %358 = vmatprep.subr.mxu0 %v357
  %v359 = vand.u32 %v27, 4294901760
  %v360 = vsub.f32 %v27, %v359
  %v361 = vand.u32 %v360, 4294901760
  %v362 = vsub.f32 %v360, %v361
  %v363 = vand.u32 %v362, 4294901760
  %364 = vmatpush1.msra.mxu0 %v363
  %v365 = vand.u32 %v24, 4294901760
  %v366 = vsub.f32 %v24, %v365
  %v367 = vand.u32 %v366, 4294901760
  %v368 = vsub.f32 %v366, %v367
  %v369 = vand.u32 %v368, 4294901760
  %370 = vmatprep.subr.mxu0 %v369
  %v371 = vand.u32 %v23, 4294901760
  %v372 = vsub.f32 %v23, %v371
  %v373 = vand.u32 %v372, 4294901760
  %v374 = vsub.f32 %v372, %v373
  %v375 = vand.u32 %v374, 4294901760
  %376 = vmatpush1.msra.mxu0 %v375
  %v377 = vand.u32 %v20, 4294901760
  %v378 = vsub.f32 %v20, %v377
  %v379 = vand.u32 %v378, 4294901760
  %v380 = vsub.f32 %v378, %v379
  %v381 = vand.u32 %v380, 4294901760
  %382 = vmatprep.subr.mxu0 %v381
  %v383 = vand.u32 %v19, 4294901760
  %v384 = vsub.f32 %v19, %v383
  %v385 = vand.u32 %v384, 4294901760
  %v386 = vsub.f32 %v384, %v385
  %v387 = vand.u32 %v386, 4294901760
  %388 = vmatpush1.msra.mxu0 %v387
  %v389 = vand.u32 %v16, 4294901760
  %v390 = vsub.f32 %v16, %v389
  %v391 = vand.u32 %v390, 4294901760
  %v392 = vsub.f32 %v390, %v391
  %v393 = vand.u32 %v392, 4294901760
  %394 = vmatprep.subr.mxu0 %v393
  %v395 = vand.u32 %v15, 4294901760
  %v396 = vsub.f32 %v15, %v395
  %v397 = vand.u32 %v396, 4294901760
  %v398 = vsub.f32 %v396, %v397
  %v399 = vand.u32 %v398, 4294901760
  %400 = vmatpush1.msra.mxu0 %v399
  %401 = vmatprep.subr.mxu0 0.0
  %402 = vmatpush2.msra.mxu0 0.0
  %403 = vmatprep.subr.mxu0 0.0
  %404 = vmatpush2.msra.mxu0 0.0
  %405 = vmatprep.subr.mxu0 0.0
  %406 = vmatpush2.msra.mxu0 0.0
  %407 = vmatprep.subr.mxu0 0.0
  %408 = vmatpush2.msra.mxu0 0.0
  %409 = vmatprep.subr.mxu0 0.0
  %410 = vmatpush2.msra.mxu0 0.0
  %411 = vmatprep.subr.mxu0 0.0
  %412 = vmatpush2.msra.mxu0 0.0
  %413 = vmatprep.subr.mxu0 0.0
  %414 = vmatpush2.msra.mxu0 0.0
  %415 = vmatprep.subr.mxu0 0.0
  %416 = vmatpush2.msra.mxu0 0.0
  %417 = vmatprep.subr.mxu0 0.0
  %418 = vmatpush2.msra.mxu0 0.0
  %419 = vmatprep.subr.mxu0 0.0
  %420 = vmatpush2.msra.mxu0 0.0
  %421 = vmatprep.subr.mxu0 0.0
  %422 = vmatpush2.msra.mxu0 0.0
  %423 = vmatprep.subr.mxu0 0.0
  %424 = vmatpush2.msra.mxu0 0.0
  %425 = vmatprep.subr.mxu0 0.0
  %426 = vmatpush2.msra.mxu0 0.0
  %427 = vmatprep.subr.mxu0 0.0
  %428 = vmatpush2.msra.mxu0 0.0
  %429 = vmatprep.subr.mxu0 0.0
  %430 = vmatpush2.msra.mxu0 0.0
  %431 = vmatprep.subr.mxu0 0.0
  %432 = vmatpush2.msra.mxu0 0.0
  %433 = vmatprep.mubr.f32.mxu0 0.0
  %v434 = vand.u32 %v14, 4294901760
  %435 = vmatmul.mubr.f32.gmra.mxu0 %v434
  %v436 = vpop.f32.mrf.mxu0
  %v437 = vadd.f32 %v205, %v436
  %v438 = vpop.f32.mrf.mxu0
  %v439 = vadd.f32 %v207, %v438
  %440 = vdwg.mxu0
  %v441 = vand.u32 %v76, 4294901760
  %v442 = vsub.f32 %v76, %v441
  %443 = vmatprep.subr.mxu0 %v442
  %v444 = vand.u32 %v75, 4294901760
  %v445 = vsub.f32 %v75, %v444
  %446 = vmatpush1.msra.mxu0 %v445
  %v447 = vand.u32 %v72, 4294901760
  %v448 = vsub.f32 %v72, %v447
  %449 = vmatprep.subr.mxu0 %v448
  %v450 = vand.u32 %v71, 4294901760
  %v451 = vsub.f32 %v71, %v450
  %452 = vmatpush1.msra.mxu0 %v451
  %v453 = vand.u32 %v68, 4294901760
  %v454 = vsub.f32 %v68, %v453
  %455 = vmatprep.subr.mxu0 %v454
  %v456 = vand.u32 %v67, 4294901760
  %v457 = vsub.f32 %v67, %v456
  %458 = vmatpush1.msra.mxu0 %v457
  %v459 = vand.u32 %v64, 4294901760
  %v460 = vsub.f32 %v64, %v459
  %461 = vmatprep.subr.mxu0 %v460
  %v462 = vand.u32 %v63, 4294901760
  %v463 = vsub.f32 %v63, %v462
  %464 = vmatpush1.msra.mxu0 %v463
  %v465 = vand.u32 %v60, 4294901760
  %v466 = vsub.f32 %v60, %v465
  %467 = vmatprep.subr.mxu0 %v466
  %v468 = vand.u32 %v59, 4294901760
  %v469 = vsub.f32 %v59, %v468
  %470 = vmatpush1.msra.mxu0 %v469
  %v471 = vand.u32 %v56, 4294901760
  %v472 = vsub.f32 %v56, %v471
  %473 = vmatprep.subr.mxu0 %v472
  %v474 = vand.u32 %v55, 4294901760
  %v475 = vsub.f32 %v55, %v474
  %476 = vmatpush1.msra.mxu0 %v475
  %v477 = vand.u32 %v52, 4294901760
  %v478 = vsub.f32 %v52, %v477
  %479 = vmatprep.subr.mxu0 %v478
  %v480 = vand.u32 %v51, 4294901760
  %v481 = vsub.f32 %v51, %v480
  %482 = vmatpush1.msra.mxu0 %v481
  %v483 = vand.u32 %v48, 4294901760
  %v484 = vsub.f32 %v48, %v483
  %485 = vmatprep.subr.mxu0 %v484
  %v486 = vand.u32 %v47, 4294901760
  %v487 = vsub.f32 %v47, %v486
  %488 = vmatpush1.msra.mxu0 %v487
  %v489 = vand.u32 %v44, 4294901760
  %v490 = vsub.f32 %v44, %v489
  %491 = vmatprep.subr.mxu0 %v490
  %v492 = vand.u32 %v43, 4294901760
  %v493 = vsub.f32 %v43, %v492
  %494 = vmatpush1.msra.mxu0 %v493
  %v495 = vand.u32 %v40, 4294901760
  %v496 = vsub.f32 %v40, %v495
  %497 = vmatprep.subr.mxu0 %v496
  %v498 = vand.u32 %v39, 4294901760
  %v499 = vsub.f32 %v39, %v498
  %500 = vmatpush1.msra.mxu0 %v499
  %v501 = vand.u32 %v36, 4294901760
  %v502 = vsub.f32 %v36, %v501
  %503 = vmatprep.subr.mxu0 %v502
  %v504 = vand.u32 %v35, 4294901760
  %v505 = vsub.f32 %v35, %v504
  %506 = vmatpush1.msra.mxu0 %v505
  %v507 = vand.u32 %v32, 4294901760
  %v508 = vsub.f32 %v32, %v507
  %509 = vmatprep.subr.mxu0 %v508
  %v510 = vand.u32 %v31, 4294901760
  %v511 = vsub.f32 %v31, %v510
  %512 = vmatpush1.msra.mxu0 %v511
  %v513 = vand.u32 %v28, 4294901760
  %v514 = vsub.f32 %v28, %v513
  %515 = vmatprep.subr.mxu0 %v514
  %v516 = vand.u32 %v27, 4294901760
  %v517 = vsub.f32 %v27, %v516
  %518 = vmatpush1.msra.mxu0 %v517
  %v519 = vand.u32 %v24, 4294901760
  %v520 = vsub.f32 %v24, %v519
  %521 = vmatprep.subr.mxu0 %v520
  %v522 = vand.u32 %v23, 4294901760
  %v523 = vsub.f32 %v23, %v522
  %524 = vmatpush1.msra.mxu0 %v523
  %v525 = vand.u32 %v20, 4294901760
  %v526 = vsub.f32 %v20, %v525
  %527 = vmatprep.subr.mxu0 %v526
  %v528 = vand.u32 %v19, 4294901760
  %v529 = vsub.f32 %v19, %v528
  %530 = vmatpush1.msra.mxu0 %v529
  %v531 = vand.u32 %v16, 4294901760
  %v532 = vsub.f32 %v16, %v531
  %533 = vmatprep.subr.mxu0 %v532
  %v534 = vand.u32 %v15, 4294901760
  %v535 = vsub.f32 %v15, %v534
  %536 = vmatpush1.msra.mxu0 %v535
  %537 = vmatprep.subr.mxu0 0.0
  %538 = vmatpush2.msra.mxu0 0.0
  %539 = vmatprep.subr.mxu0 0.0
  %540 = vmatpush2.msra.mxu0 0.0
  %541 = vmatprep.subr.mxu0 0.0
  %542 = vmatpush2.msra.mxu0 0.0
  %543 = vmatprep.subr.mxu0 0.0
  %544 = vmatpush2.msra.mxu0 0.0
  %545 = vmatprep.subr.mxu0 0.0
  %546 = vmatpush2.msra.mxu0 0.0
  %547 = vmatprep.subr.mxu0 0.0
  %548 = vmatpush2.msra.mxu0 0.0
  %549 = vmatprep.subr.mxu0 0.0
  %550 = vmatpush2.msra.mxu0 0.0
  %551 = vmatprep.subr.mxu0 0.0
  %552 = vmatpush2.msra.mxu0 0.0
  %553 = vmatprep.subr.mxu0 0.0
  %554 = vmatpush2.msra.mxu0 0.0
  %555 = vmatprep.subr.mxu0 0.0
  %556 = vmatpush2.msra.mxu0 0.0
  %557 = vmatprep.subr.mxu0 0.0
  %558 = vmatpush2.msra.mxu0 0.0
  %559 = vmatprep.subr.mxu0 0.0
  %560 = vmatpush2.msra.mxu0 0.0
  %561 = vmatprep.subr.mxu0 0.0
  %562 = vmatpush2.msra.mxu0 0.0
  %563 = vmatprep.subr.mxu0 0.0
  %564 = vmatpush2.msra.mxu0 0.0
  %565 = vmatprep.subr.mxu0 0.0
  %566 = vmatpush2.msra.mxu0 0.0
  %567 = vmatprep.subr.mxu0 0.0
  %568 = vmatpush2.msra.mxu0 0.0
  %569 = vmatprep.mubr.f32.mxu0 0.0
  %v570 = vand.u32 %v14, 4294901760
  %v571 = vsub.f32 %v14, %v570
  %572 = vmatmul.mubr.f32.gmra.mxu0 %v571
  %v573 = vpop.f32.mrf.mxu0
  %v574 = vadd.f32 %v437, %v573
  %v575 = vpop.f32.mrf.mxu0
  %v576 = vadd.f32 %v439, %v575
  %577 = vdwg.mxu0
  %v578 = vand.u32 %v76, 4294901760
  %579 = vmatprep.subr.mxu0 %v578
  %v580 = vand.u32 %v75, 4294901760
  %581 = vmatpush1.msra.mxu0 %v580
  %v582 = vand.u32 %v72, 4294901760
  %583 = vmatprep.subr.mxu0 %v582
  %v584 = vand.u32 %v71, 4294901760
  %585 = vmatpush1.msra.mxu0 %v584
  %v586 = vand.u32 %v68, 4294901760
  %587 = vmatprep.subr.mxu0 %v586
  %v588 = vand.u32 %v67, 4294901760
  %589 = vmatpush1.msra.mxu0 %v588
  %v590 = vand.u32 %v64, 4294901760
  %591 = vmatprep.subr.mxu0 %v590
  %v592 = vand.u32 %v63, 4294901760
  %593 = vmatpush1.msra.mxu0 %v592
  %v594 = vand.u32 %v60, 4294901760
  %595 = vmatprep.subr.mxu0 %v594
  %v596 = vand.u32 %v59, 4294901760
  %597 = vmatpush1.msra.mxu0 %v596
  %v598 = vand.u32 %v56, 4294901760
  %599 = vmatprep.subr.mxu0 %v598
  %v600 = vand.u32 %v55, 4294901760
  %601 = vmatpush1.msra.mxu0 %v600
  %v602 = vand.u32 %v52, 4294901760
  %603 = vmatprep.subr.mxu0 %v602
  %v604 = vand.u32 %v51, 4294901760
  %605 = vmatpush1.msra.mxu0 %v604
  %v606 = vand.u32 %v48, 4294901760
  %607 = vmatprep.subr.mxu0 %v606
  %v608 = vand.u32 %v47, 4294901760
  %609 = vmatpush1.msra.mxu0 %v608
  %v610 = vand.u32 %v44, 4294901760
  %611 = vmatprep.subr.mxu0 %v610
  %v612 = vand.u32 %v43, 4294901760
  %613 = vmatpush1.msra.mxu0 %v612
  %v614 = vand.u32 %v40, 4294901760
  %615 = vmatprep.subr.mxu0 %v614
  %v616 = vand.u32 %v39, 4294901760
  %617 = vmatpush1.msra.mxu0 %v616
  %v618 = vand.u32 %v36, 4294901760
  %619 = vmatprep.subr.mxu0 %v618
  %v620 = vand.u32 %v35, 4294901760
  %621 = vmatpush1.msra.mxu0 %v620
  %v622 = vand.u32 %v32, 4294901760
  %623 = vmatprep.subr.mxu0 %v622
  %v624 = vand.u32 %v31, 4294901760
  %625 = vmatpush1.msra.mxu0 %v624
  %v626 = vand.u32 %v28, 4294901760
  %627 = vmatprep.subr.mxu0 %v626
  %v628 = vand.u32 %v27, 4294901760
  %629 = vmatpush1.msra.mxu0 %v628
  %v630 = vand.u32 %v24, 4294901760
  %631 = vmatprep.subr.mxu0 %v630
  %v632 = vand.u32 %v23, 4294901760
  %633 = vmatpush1.msra.mxu0 %v632
  %v634 = vand.u32 %v20, 4294901760
  %635 = vmatprep.subr.mxu0 %v634
  %v636 = vand.u32 %v19, 4294901760
  %637 = vmatpush1.msra.mxu0 %v636
  %v638 = vand.u32 %v16, 4294901760
  %639 = vmatprep.subr.mxu0 %v638
  %v640 = vand.u32 %v15, 4294901760
  %641 = vmatpush1.msra.mxu0 %v640
  %642 = vmatprep.subr.mxu0 0.0
  %643 = vmatpush2.msra.mxu0 0.0
  %644 = vmatprep.subr.mxu0 0.0
  %645 = vmatpush2.msra.mxu0 0.0
  %646 = vmatprep.subr.mxu0 0.0
  %647 = vmatpush2.msra.mxu0 0.0
  %648 = vmatprep.subr.mxu0 0.0
  %649 = vmatpush2.msra.mxu0 0.0
  %650 = vmatprep.subr.mxu0 0.0
  %651 = vmatpush2.msra.mxu0 0.0
  %652 = vmatprep.subr.mxu0 0.0
  %653 = vmatpush2.msra.mxu0 0.0
  %654 = vmatprep.subr.mxu0 0.0
  %655 = vmatpush2.msra.mxu0 0.0
  %656 = vmatprep.subr.mxu0 0.0
  %657 = vmatpush2.msra.mxu0 0.0
  %658 = vmatprep.subr.mxu0 0.0
  %659 = vmatpush2.msra.mxu0 0.0
  %660 = vmatprep.subr.mxu0 0.0
  %661 = vmatpush2.msra.mxu0 0.0
  %662 = vmatprep.subr.mxu0 0.0
  %663 = vmatpush2.msra.mxu0 0.0
  %664 = vmatprep.subr.mxu0 0.0
  %665 = vmatpush2.msra.mxu0 0.0
  %666 = vmatprep.subr.mxu0 0.0
  %667 = vmatpush2.msra.mxu0 0.0
  %668 = vmatprep.subr.mxu0 0.0
  %669 = vmatpush2.msra.mxu0 0.0
  %670 = vmatprep.subr.mxu0 0.0
  %671 = vmatpush2.msra.mxu0 0.0
  %672 = vmatprep.subr.mxu0 0.0
  %673 = vmatpush2.msra.mxu0 0.0
  %674 = vmatprep.mubr.f32.mxu0 0.0
  %v675 = vand.u32 %v14, 4294901760
  %v676 = vsub.f32 %v14, %v675
  %v677 = vand.u32 %v676, 4294901760
  %678 = vmatmul.mubr.f32.gmra.mxu0 %v677
  %v679 = vpop.f32.mrf.mxu0
  %v680 = vadd.f32 %v574, %v679
  %v681 = vpop.f32.mrf.mxu0
  %v682 = vadd.f32 %v576, %v681
  %683 = vdwg.mxu0
  %v684 = vand.u32 %v76, 4294901760
  %v685 = vsub.f32 %v76, %v684
  %v686 = vand.u32 %v685, 4294901760
  %687 = vmatprep.subr.mxu0 %v686
  %v688 = vand.u32 %v75, 4294901760
  %v689 = vsub.f32 %v75, %v688
  %v690 = vand.u32 %v689, 4294901760
  %691 = vmatpush1.msra.mxu0 %v690
  %v692 = vand.u32 %v72, 4294901760
  %v693 = vsub.f32 %v72, %v692
  %v694 = vand.u32 %v693, 4294901760
  %695 = vmatprep.subr.mxu0 %v694
  %v696 = vand.u32 %v71, 4294901760
  %v697 = vsub.f32 %v71, %v696
  %v698 = vand.u32 %v697, 4294901760
  %699 = vmatpush1.msra.mxu0 %v698
  %v700 = vand.u32 %v68, 4294901760
  %v701 = vsub.f32 %v68, %v700
  %v702 = vand.u32 %v701, 4294901760
  %703 = vmatprep.subr.mxu0 %v702
  %v704 = vand.u32 %v67, 4294901760
  %v705 = vsub.f32 %v67, %v704
  %v706 = vand.u32 %v705, 4294901760
  %707 = vmatpush1.msra.mxu0 %v706
  %v708 = vand.u32 %v64, 4294901760
  %v709 = vsub.f32 %v64, %v708
  %v710 = vand.u32 %v709, 4294901760
  %711 = vmatprep.subr.mxu0 %v710
  %v712 = vand.u32 %v63, 4294901760
  %v713 = vsub.f32 %v63, %v712
  %v714 = vand.u32 %v713, 4294901760
  %715 = vmatpush1.msra.mxu0 %v714
  %v716 = vand.u32 %v60, 4294901760
  %v717 = vsub.f32 %v60, %v716
  %v718 = vand.u32 %v717, 4294901760
  %719 = vmatprep.subr.mxu0 %v718
  %v720 = vand.u32 %v59, 4294901760
  %v721 = vsub.f32 %v59, %v720
  %v722 = vand.u32 %v721, 4294901760
  %723 = vmatpush1.msra.mxu0 %v722
  %v724 = vand.u32 %v56, 4294901760
  %v725 = vsub.f32 %v56, %v724
  %v726 = vand.u32 %v725, 4294901760
  %727 = vmatprep.subr.mxu0 %v726
  %v728 = vand.u32 %v55, 4294901760
  %v729 = vsub.f32 %v55, %v728
  %v730 = vand.u32 %v729, 4294901760
  %731 = vmatpush1.msra.mxu0 %v730
  %v732 = vand.u32 %v52, 4294901760
  %v733 = vsub.f32 %v52, %v732
  %v734 = vand.u32 %v733, 4294901760
  %735 = vmatprep.subr.mxu0 %v734
  %v736 = vand.u32 %v51, 4294901760
  %v737 = vsub.f32 %v51, %v736
  %v738 = vand.u32 %v737, 4294901760
  %739 = vmatpush1.msra.mxu0 %v738
  %v740 = vand.u32 %v48, 4294901760
  %v741 = vsub.f32 %v48, %v740
  %v742 = vand.u32 %v741, 4294901760
  %743 = vmatprep.subr.mxu0 %v742
  %v744 = vand.u32 %v47, 4294901760
  %v745 = vsub.f32 %v47, %v744
  %v746 = vand.u32 %v745, 4294901760
  %747 = vmatpush1.msra.mxu0 %v746
  %v748 = vand.u32 %v44, 4294901760
  %v749 = vsub.f32 %v44, %v748
  %v750 = vand.u32 %v749, 4294901760
  %751 = vmatprep.subr.mxu0 %v750
  %v752 = vand.u32 %v43, 4294901760
  %v753 = vsub.f32 %v43, %v752
  %v754 = vand.u32 %v753, 4294901760
  %755 = vmatpush1.msra.mxu0 %v754
  %v756 = vand.u32 %v40, 4294901760
  %v757 = vsub.f32 %v40, %v756
  %v758 = vand.u32 %v757, 4294901760
  %759 = vmatprep.subr.mxu0 %v758
  %v760 = vand.u32 %v39, 4294901760
  %v761 = vsub.f32 %v39, %v760
  %v762 = vand.u32 %v761, 4294901760
  %763 = vmatpush1.msra.mxu0 %v762
  %v764 = vand.u32 %v36, 4294901760
  %v765 = vsub.f32 %v36, %v764
  %v766 = vand.u32 %v765, 4294901760
  %767 = vmatprep.subr.mxu0 %v766
  %v768 = vand.u32 %v35, 4294901760
  %v769 = vsub.f32 %v35, %v768
  %v770 = vand.u32 %v769, 4294901760
  %771 = vmatpush1.msra.mxu0 %v770
  %v772 = vand.u32 %v32, 4294901760
  %v773 = vsub.f32 %v32, %v772
  %v774 = vand.u32 %v773, 4294901760
  %775 = vmatprep.subr.mxu0 %v774
  %v776 = vand.u32 %v31, 4294901760
  %v777 = vsub.f32 %v31, %v776
  %v778 = vand.u32 %v777, 4294901760
  %779 = vmatpush1.msra.mxu0 %v778
  %v780 = vand.u32 %v28, 4294901760
  %v781 = vsub.f32 %v28, %v780
  %v782 = vand.u32 %v781, 4294901760
  %783 = vmatprep.subr.mxu0 %v782
  %v784 = vand.u32 %v27, 4294901760
  %v785 = vsub.f32 %v27, %v784
  %v786 = vand.u32 %v785, 4294901760
  %787 = vmatpush1.msra.mxu0 %v786
  %v788 = vand.u32 %v24, 4294901760
  %v789 = vsub.f32 %v24, %v788
  %v790 = vand.u32 %v789, 4294901760
  %791 = vmatprep.subr.mxu0 %v790
  %v792 = vand.u32 %v23, 4294901760
  %v793 = vsub.f32 %v23, %v792
  %v794 = vand.u32 %v793, 4294901760
  %795 = vmatpush1.msra.mxu0 %v794
  %v796 = vand.u32 %v20, 4294901760
  %v797 = vsub.f32 %v20, %v796
  %v798 = vand.u32 %v797, 4294901760
  %799 = vmatprep.subr.mxu0 %v798
  %v800 = vand.u32 %v19, 4294901760
  %v801 = vsub.f32 %v19, %v800
  %v802 = vand.u32 %v801, 4294901760
  %803 = vmatpush1.msra.mxu0 %v802
  %v804 = vand.u32 %v16, 4294901760
  %v805 = vsub.f32 %v16, %v804
  %v806 = vand.u32 %v805, 4294901760
  %807 = vmatprep.subr.mxu0 %v806
  %v808 = vand.u32 %v15, 4294901760
  %v809 = vsub.f32 %v15, %v808
  %v810 = vand.u32 %v809, 4294901760
  %811 = vmatpush1.msra.mxu0 %v810
  %812 = vmatprep.subr.mxu0 0.0
  %813 = vmatpush2.msra.mxu0 0.0
  %814 = vmatprep.subr.mxu0 0.0
  %815 = vmatpush2.msra.mxu0 0.0
  %816 = vmatprep.subr.mxu0 0.0
  %817 = vmatpush2.msra.mxu0 0.0
  %818 = vmatprep.subr.mxu0 0.0
  %819 = vmatpush2.msra.mxu0 0.0
  %820 = vmatprep.subr.mxu0 0.0
  %821 = vmatpush2.msra.mxu0 0.0
  %822 = vmatprep.subr.mxu0 0.0
  %823 = vmatpush2.msra.mxu0 0.0
  %824 = vmatprep.subr.mxu0 0.0
  %825 = vmatpush2.msra.mxu0 0.0
  %826 = vmatprep.subr.mxu0 0.0
  %827 = vmatpush2.msra.mxu0 0.0
  %828 = vmatprep.subr.mxu0 0.0
  %829 = vmatpush2.msra.mxu0 0.0
  %830 = vmatprep.subr.mxu0 0.0
  %831 = vmatpush2.msra.mxu0 0.0
  %832 = vmatprep.subr.mxu0 0.0
  %833 = vmatpush2.msra.mxu0 0.0
  %834 = vmatprep.subr.mxu0 0.0
  %835 = vmatpush2.msra.mxu0 0.0
  %836 = vmatprep.subr.mxu0 0.0
  %837 = vmatpush2.msra.mxu0 0.0
  %838 = vmatprep.subr.mxu0 0.0
  %839 = vmatpush2.msra.mxu0 0.0
  %840 = vmatprep.subr.mxu0 0.0
  %841 = vmatpush2.msra.mxu0 0.0
  %842 = vmatprep.subr.mxu0 0.0
  %843 = vmatpush2.msra.mxu0 0.0
  %844 = vmatprep.mubr.f32.mxu0 0.0
  %v845 = vand.u32 %v14, 4294901760
  %846 = vmatmul.mubr.f32.gmra.mxu0 %v845
  %v847 = vpop.f32.mrf.mxu0
  %v848 = vadd.f32 %v680, %v847
  %v849 = vpop.f32.mrf.mxu0
  %v850 = vadd.f32 %v682, %v849
  %851 = vdwg.mxu0
  %v852 = vand.u32 %v76, 4294901760
  %853 = vmatprep.subr.mxu0 %v852
  %v854 = vand.u32 %v75, 4294901760
  %855 = vmatpush1.msra.mxu0 %v854
  %v856 = vand.u32 %v72, 4294901760
  %857 = vmatprep.subr.mxu0 %v856
  %v858 = vand.u32 %v71, 4294901760
  %859 = vmatpush1.msra.mxu0 %v858
  %v860 = vand.u32 %v68, 4294901760
  %861 = vmatprep.subr.mxu0 %v860
  %v862 = vand.u32 %v67, 4294901760
  %863 = vmatpush1.msra.mxu0 %v862
  %v864 = vand.u32 %v64, 4294901760
  %865 = vmatprep.subr.mxu0 %v864
  %v866 = vand.u32 %v63, 4294901760
  %867 = vmatpush1.msra.mxu0 %v866
  %v868 = vand.u32 %v60, 4294901760
  %869 = vmatprep.subr.mxu0 %v868
  %v870 = vand.u32 %v59, 4294901760
  %871 = vmatpush1.msra.mxu0 %v870
  %v872 = vand.u32 %v56, 4294901760
  %873 = vmatprep.subr.mxu0 %v872
  %v874 = vand.u32 %v55, 4294901760
  %875 = vmatpush1.msra.mxu0 %v874
  %v876 = vand.u32 %v52, 4294901760
  %877 = vmatprep.subr.mxu0 %v876
  %v878 = vand.u32 %v51, 4294901760
  %879 = vmatpush1.msra.mxu0 %v878
  %v880 = vand.u32 %v48, 4294901760
  %881 = vmatprep.subr.mxu0 %v880
  %v882 = vand.u32 %v47, 4294901760
  %883 = vmatpush1.msra.mxu0 %v882
  %v884 = vand.u32 %v44, 4294901760
  %885 = vmatprep.subr.mxu0 %v884
  %v886 = vand.u32 %v43, 4294901760
  %887 = vmatpush1.msra.mxu0 %v886
  %v888 = vand.u32 %v40, 4294901760
  %889 = vmatprep.subr.mxu0 %v888
  %v890 = vand.u32 %v39, 4294901760
  %891 = vmatpush1.msra.mxu0 %v890
  %v892 = vand.u32 %v36, 4294901760
  %893 = vmatprep.subr.mxu0 %v892
  %v894 = vand.u32 %v35, 4294901760
  %895 = vmatpush1.msra.mxu0 %v894
  %v896 = vand.u32 %v32, 4294901760
  %897 = vmatprep.subr.mxu0 %v896
  %v898 = vand.u32 %v31, 4294901760
  %899 = vmatpush1.msra.mxu0 %v898
  %v900 = vand.u32 %v28, 4294901760
  %901 = vmatprep.subr.mxu0 %v900
  %v902 = vand.u32 %v27, 4294901760
  %903 = vmatpush1.msra.mxu0 %v902
  %v904 = vand.u32 %v24, 4294901760
  %905 = vmatprep.subr.mxu0 %v904
  %v906 = vand.u32 %v23, 4294901760
  %907 = vmatpush1.msra.mxu0 %v906
  %v908 = vand.u32 %v20, 4294901760
  %909 = vmatprep.subr.mxu0 %v908
  %v910 = vand.u32 %v19, 4294901760
  %911 = vmatpush1.msra.mxu0 %v910
  %v912 = vand.u32 %v16, 4294901760
  %913 = vmatprep.subr.mxu0 %v912
  %v914 = vand.u32 %v15, 4294901760
  %915 = vmatpush1.msra.mxu0 %v914
  %916 = vmatprep.subr.mxu0 0.0
  %917 = vmatpush2.msra.mxu0 0.0
  %918 = vmatprep.subr.mxu0 0.0
  %919 = vmatpush2.msra.mxu0 0.0
  %920 = vmatprep.subr.mxu0 0.0
  %921 = vmatpush2.msra.mxu0 0.0
  %922 = vmatprep.subr.mxu0 0.0
  %923 = vmatpush2.msra.mxu0 0.0
  %924 = vmatprep.subr.mxu0 0.0
  %925 = vmatpush2.msra.mxu0 0.0
  %926 = vmatprep.subr.mxu0 0.0
  %927 = vmatpush2.msra.mxu0 0.0
  %928 = vmatprep.subr.mxu0 0.0
  %929 = vmatpush2.msra.mxu0 0.0
  %930 = vmatprep.subr.mxu0 0.0
  %931 = vmatpush2.msra.mxu0 0.0
  %932 = vmatprep.subr.mxu0 0.0
  %933 = vmatpush2.msra.mxu0 0.0
  %934 = vmatprep.subr.mxu0 0.0
  %935 = vmatpush2.msra.mxu0 0.0
  %936 = vmatprep.subr.mxu0 0.0
  %937 = vmatpush2.msra.mxu0 0.0
  %938 = vmatprep.subr.mxu0 0.0
  %939 = vmatpush2.msra.mxu0 0.0
  %940 = vmatprep.subr.mxu0 0.0
  %941 = vmatpush2.msra.mxu0 0.0
  %942 = vmatprep.subr.mxu0 0.0
  %943 = vmatpush2.msra.mxu0 0.0
  %944 = vmatprep.subr.mxu0 0.0
  %945 = vmatpush2.msra.mxu0 0.0
  %946 = vmatprep.subr.mxu0 0.0
  %947 = vmatpush2.msra.mxu0 0.0
  %948 = vmatprep.mubr.f32.mxu0 0.0
  %v949 = vand.u32 %v14, 4294901760
  %950 = vmatmul.mubr.f32.gmra.mxu0 %v949
  %v951 = vpop.f32.mrf.mxu0
  %v952 = vadd.f32 %v848, %v951
  %v953 = vpop.f32.mrf.mxu0
  %v954 = vadd.f32 %v850, %v953
  %955 = vdwg.mxu0
  %v956 = vand.u32 %v78, 4294901760
  %957 = vmatprep.subr.mxu0 %v956
  %v958 = vand.u32 %v77, 4294901760
  %959 = vmatpush1.msra.mxu0 %v958
  %v960 = vand.u32 %v74, 4294901760
  %961 = vmatprep.subr.mxu0 %v960
  %v962 = vand.u32 %v73, 4294901760
  %963 = vmatpush1.msra.mxu0 %v962
  %v964 = vand.u32 %v70, 4294901760
  %965 = vmatprep.subr.mxu0 %v964
  %v966 = vand.u32 %v69, 4294901760
  %967 = vmatpush1.msra.mxu0 %v966
  %v968 = vand.u32 %v66, 4294901760
  %969 = vmatprep.subr.mxu0 %v968
  %v970 = vand.u32 %v65, 4294901760
  %971 = vmatpush1.msra.mxu0 %v970
  %v972 = vand.u32 %v62, 4294901760
  %973 = vmatprep.subr.mxu0 %v972
  %v974 = vand.u32 %v61, 4294901760
  %975 = vmatpush1.msra.mxu0 %v974
  %v976 = vand.u32 %v58, 4294901760
  %977 = vmatprep.subr.mxu0 %v976
  %v978 = vand.u32 %v57, 4294901760
  %979 = vmatpush1.msra.mxu0 %v978
  %v980 = vand.u32 %v54, 4294901760
  %981 = vmatprep.subr.mxu0 %v980
  %v982 = vand.u32 %v53, 4294901760
  %983 = vmatpush1.msra.mxu0 %v982
  %v984 = vand.u32 %v50, 4294901760
  %985 = vmatprep.subr.mxu0 %v984
  %v986 = vand.u32 %v49, 4294901760
  %987 = vmatpush1.msra.mxu0 %v986
  %v988 = vand.u32 %v46, 4294901760
  %989 = vmatprep.subr.mxu0 %v988
  %v990 = vand.u32 %v45, 4294901760
  %991 = vmatpush1.msra.mxu0 %v990
  %v992 = vand.u32 %v42, 4294901760
  %993 = vmatprep.subr.mxu0 %v992
  %v994 = vand.u32 %v41, 4294901760
  %995 = vmatpush1.msra.mxu0 %v994
  %v996 = vand.u32 %v38, 4294901760
  %997 = vmatprep.subr.mxu0 %v996
  %v998 = vand.u32 %v37, 4294901760
  %999 = vmatpush1.msra.mxu0 %v998
  %v1000 = vand.u32 %v34, 4294901760
  %1001 = vmatprep.subr.mxu0 %v1000
  %v1002 = vand.u32 %v33, 4294901760
  %1003 = vmatpush1.msra.mxu0 %v1002
  %v1004 = vand.u32 %v30, 4294901760
  %1005 = vmatprep.subr.mxu0 %v1004
  %v1006 = vand.u32 %v29, 4294901760
  %1007 = vmatpush1.msra.mxu0 %v1006
  %v1008 = vand.u32 %v26, 4294901760
  %1009 = vmatprep.subr.mxu0 %v1008
  %v1010 = vand.u32 %v25, 4294901760
  %1011 = vmatpush1.msra.mxu0 %v1010
  %v1012 = vand.u32 %v22, 4294901760
  %1013 = vmatprep.subr.mxu0 %v1012
  %v1014 = vand.u32 %v21, 4294901760
  %1015 = vmatpush1.msra.mxu0 %v1014
  %v1016 = vand.u32 %v18, 4294901760
  %1017 = vmatprep.subr.mxu0 %v1016
  %v1018 = vand.u32 %v17, 4294901760
  %1019 = vmatpush1.msra.mxu0 %v1018
  %1020 = vmatprep.subr.mxu0 0.0
  %1021 = vmatpush2.msra.mxu0 0.0
  %1022 = vmatprep.subr.mxu0 0.0
  %1023 = vmatpush2.msra.mxu0 0.0
  %1024 = vmatprep.subr.mxu0 0.0
  %1025 = vmatpush2.msra.mxu0 0.0
  %1026 = vmatprep.subr.mxu0 0.0
  %1027 = vmatpush2.msra.mxu0 0.0
  %1028 = vmatprep.subr.mxu0 0.0
  %1029 = vmatpush2.msra.mxu0 0.0
  %1030 = vmatprep.subr.mxu0 0.0
  %1031 = vmatpush2.msra.mxu0 0.0
  %1032 = vmatprep.subr.mxu0 0.0
  %1033 = vmatpush2.msra.mxu0 0.0
  %1034 = vmatprep.subr.mxu0 0.0
  %1035 = vmatpush2.msra.mxu0 0.0
  %1036 = vmatprep.subr.mxu0 0.0
  %1037 = vmatpush2.msra.mxu0 0.0
  %1038 = vmatprep.subr.mxu0 0.0
  %1039 = vmatpush2.msra.mxu0 0.0
  %1040 = vmatprep.subr.mxu0 0.0
  %1041 = vmatpush2.msra.mxu0 0.0
  %1042 = vmatprep.subr.mxu0 0.0
  %1043 = vmatpush2.msra.mxu0 0.0
  %1044 = vmatprep.subr.mxu0 0.0
  %1045 = vmatpush2.msra.mxu0 0.0
  %1046 = vmatprep.subr.mxu0 0.0
  %1047 = vmatpush2.msra.mxu0 0.0
  %1048 = vmatprep.subr.mxu0 0.0
  %1049 = vmatpush2.msra.mxu0 0.0
  %1050 = vmatprep.subr.mxu0 0.0
  %1051 = vmatpush2.msra.mxu0 0.0
  %1052 = vmatprep.mubr.f32.mxu0 0.0
  %v1053 = vand.u32 %v14, 4294901760
  %v1054 = vsub.f32 %v14, %v1053
  %v1055 = vand.u32 %v1054, 4294901760
  %v1056 = vsub.f32 %v1054, %v1055
  %v1057 = vand.u32 %v1056, 4294901760
  %1058 = vmatmul.mubr.f32.gmra.mxu0 %v1057
  %v1059 = vpop.f32.mrf.mxu0
  %v1060 = vadd.f32 %v92, %v1059
  %v1061 = vpop.f32.mrf.mxu0
  %v1062 = vadd.f32 %v96, %v1061
  %1063 = vdwg.mxu0
  %v1064 = vand.u32 %v78, 4294901760
  %v1065 = vsub.f32 %v78, %v1064
  %v1066 = vand.u32 %v1065, 4294901760
  %v1067 = vsub.f32 %v1065, %v1066
  %v1068 = vand.u32 %v1067, 4294901760
  %1069 = vmatprep.subr.mxu0 %v1068
  %v1070 = vand.u32 %v77, 4294901760
  %v1071 = vsub.f32 %v77, %v1070
  %v1072 = vand.u32 %v1071, 4294901760
  %v1073 = vsub.f32 %v1071, %v1072
  %v1074 = vand.u32 %v1073, 4294901760
  %1075 = vmatpush1.msra.mxu0 %v1074
  %v1076 = vand.u32 %v74, 4294901760
  %v1077 = vsub.f32 %v74, %v1076
  %v1078 = vand.u32 %v1077, 4294901760
  %v1079 = vsub.f32 %v1077, %v1078
  %v1080 = vand.u32 %v1079, 4294901760
  %1081 = vmatprep.subr.mxu0 %v1080
  %v1082 = vand.u32 %v73, 4294901760
  %v1083 = vsub.f32 %v73, %v1082
  %v1084 = vand.u32 %v1083, 4294901760
  %v1085 = vsub.f32 %v1083, %v1084
  %v1086 = vand.u32 %v1085, 4294901760
  %1087 = vmatpush1.msra.mxu0 %v1086
  %v1088 = vand.u32 %v70, 4294901760
  %v1089 = vsub.f32 %v70, %v1088
  %v1090 = vand.u32 %v1089, 4294901760
  %v1091 = vsub.f32 %v1089, %v1090
  %v1092 = vand.u32 %v1091, 4294901760
  %1093 = vmatprep.subr.mxu0 %v1092
  %v1094 = vand.u32 %v69, 4294901760
  %v1095 = vsub.f32 %v69, %v1094
  %v1096 = vand.u32 %v1095, 4294901760
  %v1097 = vsub.f32 %v1095, %v1096
  %v1098 = vand.u32 %v1097, 4294901760
  %1099 = vmatpush1.msra.mxu0 %v1098
  %v1100 = vand.u32 %v66, 4294901760
  %v1101 = vsub.f32 %v66, %v1100
  %v1102 = vand.u32 %v1101, 4294901760
  %v1103 = vsub.f32 %v1101, %v1102
  %v1104 = vand.u32 %v1103, 4294901760
  %1105 = vmatprep.subr.mxu0 %v1104
  %v1106 = vand.u32 %v65, 4294901760
  %v1107 = vsub.f32 %v65, %v1106
  %v1108 = vand.u32 %v1107, 4294901760
  %v1109 = vsub.f32 %v1107, %v1108
  %v1110 = vand.u32 %v1109, 4294901760
  %1111 = vmatpush1.msra.mxu0 %v1110
  %v1112 = vand.u32 %v62, 4294901760
  %v1113 = vsub.f32 %v62, %v1112
  %v1114 = vand.u32 %v1113, 4294901760
  %v1115 = vsub.f32 %v1113, %v1114
  %v1116 = vand.u32 %v1115, 4294901760
  %1117 = vmatprep.subr.mxu0 %v1116
  %v1118 = vand.u32 %v61, 4294901760
  %v1119 = vsub.f32 %v61, %v1118
  %v1120 = vand.u32 %v1119, 4294901760
  %v1121 = vsub.f32 %v1119, %v1120
  %v1122 = vand.u32 %v1121, 4294901760
  %1123 = vmatpush1.msra.mxu0 %v1122
  %v1124 = vand.u32 %v58, 4294901760
  %v1125 = vsub.f32 %v58, %v1124
  %v1126 = vand.u32 %v1125, 4294901760
  %v1127 = vsub.f32 %v1125, %v1126
  %v1128 = vand.u32 %v1127, 4294901760
  %1129 = vmatprep.subr.mxu0 %v1128
  %v1130 = vand.u32 %v57, 4294901760
  %v1131 = vsub.f32 %v57, %v1130
  %v1132 = vand.u32 %v1131, 4294901760
  %v1133 = vsub.f32 %v1131, %v1132
  %v1134 = vand.u32 %v1133, 4294901760
  %1135 = vmatpush1.msra.mxu0 %v1134
  %v1136 = vand.u32 %v54, 4294901760
  %v1137 = vsub.f32 %v54, %v1136
  %v1138 = vand.u32 %v1137, 4294901760
  %v1139 = vsub.f32 %v1137, %v1138
  %v1140 = vand.u32 %v1139, 4294901760
  %1141 = vmatprep.subr.mxu0 %v1140
  %v1142 = vand.u32 %v53, 4294901760
  %v1143 = vsub.f32 %v53, %v1142
  %v1144 = vand.u32 %v1143, 4294901760
  %v1145 = vsub.f32 %v1143, %v1144
  %v1146 = vand.u32 %v1145, 4294901760
  %1147 = vmatpush1.msra.mxu0 %v1146
  %v1148 = vand.u32 %v50, 4294901760
  %v1149 = vsub.f32 %v50, %v1148
  %v1150 = vand.u32 %v1149, 4294901760
  %v1151 = vsub.f32 %v1149, %v1150
  %v1152 = vand.u32 %v1151, 4294901760
  %1153 = vmatprep.subr.mxu0 %v1152
  %v1154 = vand.u32 %v49, 4294901760
  %v1155 = vsub.f32 %v49, %v1154
  %v1156 = vand.u32 %v1155, 4294901760
  %v1157 = vsub.f32 %v1155, %v1156
  %v1158 = vand.u32 %v1157, 4294901760
  %1159 = vmatpush1.msra.mxu0 %v1158
  %v1160 = vand.u32 %v46, 4294901760
  %v1161 = vsub.f32 %v46, %v1160
  %v1162 = vand.u32 %v1161, 4294901760
  %v1163 = vsub.f32 %v1161, %v1162
  %v1164 = vand.u32 %v1163, 4294901760
  %1165 = vmatprep.subr.mxu0 %v1164
  %v1166 = vand.u32 %v45, 4294901760
  %v1167 = vsub.f32 %v45, %v1166
  %v1168 = vand.u32 %v1167, 4294901760
  %v1169 = vsub.f32 %v1167, %v1168
  %v1170 = vand.u32 %v1169, 4294901760
  %1171 = vmatpush1.msra.mxu0 %v1170
  %v1172 = vand.u32 %v42, 4294901760
  %v1173 = vsub.f32 %v42, %v1172
  %v1174 = vand.u32 %v1173, 4294901760
  %v1175 = vsub.f32 %v1173, %v1174
  %v1176 = vand.u32 %v1175, 4294901760
  %1177 = vmatprep.subr.mxu0 %v1176
  %v1178 = vand.u32 %v41, 4294901760
  %v1179 = vsub.f32 %v41, %v1178
  %v1180 = vand.u32 %v1179, 4294901760
  %v1181 = vsub.f32 %v1179, %v1180
  %v1182 = vand.u32 %v1181, 4294901760
  %1183 = vmatpush1.msra.mxu0 %v1182
  %v1184 = vand.u32 %v38, 4294901760
  %v1185 = vsub.f32 %v38, %v1184
  %v1186 = vand.u32 %v1185, 4294901760
  %v1187 = vsub.f32 %v1185, %v1186
  %v1188 = vand.u32 %v1187, 4294901760
  %1189 = vmatprep.subr.mxu0 %v1188
  %v1190 = vand.u32 %v37, 4294901760
  %v1191 = vsub.f32 %v37, %v1190
  %v1192 = vand.u32 %v1191, 4294901760
  %v1193 = vsub.f32 %v1191, %v1192
  %v1194 = vand.u32 %v1193, 4294901760
  %1195 = vmatpush1.msra.mxu0 %v1194
  %v1196 = vand.u32 %v34, 4294901760
  %v1197 = vsub.f32 %v34, %v1196
  %v1198 = vand.u32 %v1197, 4294901760
  %v1199 = vsub.f32 %v1197, %v1198
  %v1200 = vand.u32 %v1199, 4294901760
  %1201 = vmatprep.subr.mxu0 %v1200
  %v1202 = vand.u32 %v33, 4294901760
  %v1203 = vsub.f32 %v33, %v1202
  %v1204 = vand.u32 %v1203, 4294901760
  %v1205 = vsub.f32 %v1203, %v1204
  %v1206 = vand.u32 %v1205, 4294901760
  %1207 = vmatpush1.msra.mxu0 %v1206
  %v1208 = vand.u32 %v30, 4294901760
  %v1209 = vsub.f32 %v30, %v1208
  %v1210 = vand.u32 %v1209, 4294901760
  %v1211 = vsub.f32 %v1209, %v1210
  %v1212 = vand.u32 %v1211, 4294901760
  %1213 = vmatprep.subr.mxu0 %v1212
  %v1214 = vand.u32 %v29, 4294901760
  %v1215 = vsub.f32 %v29, %v1214
  %v1216 = vand.u32 %v1215, 4294901760
  %v1217 = vsub.f32 %v1215, %v1216
  %v1218 = vand.u32 %v1217, 4294901760
  %1219 = vmatpush1.msra.mxu0 %v1218
  %v1220 = vand.u32 %v26, 4294901760
  %v1221 = vsub.f32 %v26, %v1220
  %v1222 = vand.u32 %v1221, 4294901760
  %v1223 = vsub.f32 %v1221, %v1222
  %v1224 = vand.u32 %v1223, 4294901760
  %1225 = vmatprep.subr.mxu0 %v1224
  %v1226 = vand.u32 %v25, 4294901760
  %v1227 = vsub.f32 %v25, %v1226
  %v1228 = vand.u32 %v1227, 4294901760
  %v1229 = vsub.f32 %v1227, %v1228
  %v1230 = vand.u32 %v1229, 4294901760
  %1231 = vmatpush1.msra.mxu0 %v1230
  %v1232 = vand.u32 %v22, 4294901760
  %v1233 = vsub.f32 %v22, %v1232
  %v1234 = vand.u32 %v1233, 4294901760
  %v1235 = vsub.f32 %v1233, %v1234
  %v1236 = vand.u32 %v1235, 4294901760
  %1237 = vmatprep.subr.mxu0 %v1236
  %v1238 = vand.u32 %v21, 4294901760
  %v1239 = vsub.f32 %v21, %v1238
  %v1240 = vand.u32 %v1239, 4294901760
  %v1241 = vsub.f32 %v1239, %v1240
  %v1242 = vand.u32 %v1241, 4294901760
  %1243 = vmatpush1.msra.mxu0 %v1242
  %v1244 = vand.u32 %v18, 4294901760
  %v1245 = vsub.f32 %v18, %v1244
  %v1246 = vand.u32 %v1245, 4294901760
  %v1247 = vsub.f32 %v1245, %v1246
  %v1248 = vand.u32 %v1247, 4294901760
  %1249 = vmatprep.subr.mxu0 %v1248
  %v1250 = vand.u32 %v17, 4294901760
  %v1251 = vsub.f32 %v17, %v1250
  %v1252 = vand.u32 %v1251, 4294901760
  %v1253 = vsub.f32 %v1251, %v1252
  %v1254 = vand.u32 %v1253, 4294901760
  %1255 = vmatpush1.msra.mxu0 %v1254
  %1256 = vmatprep.subr.mxu0 0.0
  %1257 = vmatpush2.msra.mxu0 0.0
  %1258 = vmatprep.subr.mxu0 0.0
  %1259 = vmatpush2.msra.mxu0 0.0
  %1260 = vmatprep.subr.mxu0 0.0
  %1261 = vmatpush2.msra.mxu0 0.0
  %1262 = vmatprep.subr.mxu0 0.0
  %1263 = vmatpush2.msra.mxu0 0.0
  %1264 = vmatprep.subr.mxu0 0.0
  %1265 = vmatpush2.msra.mxu0 0.0
  %1266 = vmatprep.subr.mxu0 0.0
  %1267 = vmatpush2.msra.mxu0 0.0
  %1268 = vmatprep.subr.mxu0 0.0
  %1269 = vmatpush2.msra.mxu0 0.0
  %1270 = vmatprep.subr.mxu0 0.0
  %1271 = vmatpush2.msra.mxu0 0.0
  %1272 = vmatprep.subr.mxu0 0.0
  %1273 = vmatpush2.msra.mxu0 0.0
  %1274 = vmatprep.subr.mxu0 0.0
  %1275 = vmatpush2.msra.mxu0 0.0
  %1276 = vmatprep.subr.mxu0 0.0
  %1277 = vmatpush2.msra.mxu0 0.0
  %1278 = vmatprep.subr.mxu0 0.0
  %1279 = vmatpush2.msra.mxu0 0.0
  %1280 = vmatprep.subr.mxu0 0.0
  %1281 = vmatpush2.msra.mxu0 0.0
  %1282 = vmatprep.subr.mxu0 0.0
  %1283 = vmatpush2.msra.mxu0 0.0
  %1284 = vmatprep.subr.mxu0 0.0
  %1285 = vmatpush2.msra.mxu0 0.0
  %1286 = vmatprep.subr.mxu0 0.0
  %1287 = vmatpush2.msra.mxu0 0.0
  %1288 = vmatprep.mubr.f32.mxu0 0.0
  %v1289 = vand.u32 %v14, 4294901760
  %1290 = vmatmul.mubr.f32.gmra.mxu0 %v1289
  %v1291 = vpop.f32.mrf.mxu0
  %v1292 = vadd.f32 %v1060, %v1291
  %v1293 = vpop.f32.mrf.mxu0
  %v1294 = vadd.f32 %v1062, %v1293
  %1295 = vdwg.mxu0
  %v1296 = vand.u32 %v78, 4294901760
  %v1297 = vsub.f32 %v78, %v1296
  %1298 = vmatprep.subr.mxu0 %v1297
  %v1299 = vand.u32 %v77, 4294901760
  %v1300 = vsub.f32 %v77, %v1299
  %1301 = vmatpush1.msra.mxu0 %v1300
  %v1302 = vand.u32 %v74, 4294901760
  %v1303 = vsub.f32 %v74, %v1302
  %1304 = vmatprep.subr.mxu0 %v1303
  %v1305 = vand.u32 %v73, 4294901760
  %v1306 = vsub.f32 %v73, %v1305
  %1307 = vmatpush1.msra.mxu0 %v1306
  %v1308 = vand.u32 %v70, 4294901760
  %v1309 = vsub.f32 %v70, %v1308
  %1310 = vmatprep.subr.mxu0 %v1309
  %v1311 = vand.u32 %v69, 4294901760
  %v1312 = vsub.f32 %v69, %v1311
  %1313 = vmatpush1.msra.mxu0 %v1312
  %v1314 = vand.u32 %v66, 4294901760
  %v1315 = vsub.f32 %v66, %v1314
  %1316 = vmatprep.subr.mxu0 %v1315
  %v1317 = vand.u32 %v65, 4294901760
  %v1318 = vsub.f32 %v65, %v1317
  %1319 = vmatpush1.msra.mxu0 %v1318
  %v1320 = vand.u32 %v62, 4294901760
  %v1321 = vsub.f32 %v62, %v1320
  %1322 = vmatprep.subr.mxu0 %v1321
  %v1323 = vand.u32 %v61, 4294901760
  %v1324 = vsub.f32 %v61, %v1323
  %1325 = vmatpush1.msra.mxu0 %v1324
  %v1326 = vand.u32 %v58, 4294901760
  %v1327 = vsub.f32 %v58, %v1326
  %1328 = vmatprep.subr.mxu0 %v1327
  %v1329 = vand.u32 %v57, 4294901760
  %v1330 = vsub.f32 %v57, %v1329
  %1331 = vmatpush1.msra.mxu0 %v1330
  %v1332 = vand.u32 %v54, 4294901760
  %v1333 = vsub.f32 %v54, %v1332
  %1334 = vmatprep.subr.mxu0 %v1333
  %v1335 = vand.u32 %v53, 4294901760
  %v1336 = vsub.f32 %v53, %v1335
  %1337 = vmatpush1.msra.mxu0 %v1336
  %v1338 = vand.u32 %v50, 4294901760
  %v1339 = vsub.f32 %v50, %v1338
  %1340 = vmatprep.subr.mxu0 %v1339
  %v1341 = vand.u32 %v49, 4294901760
  %v1342 = vsub.f32 %v49, %v1341
  %1343 = vmatpush1.msra.mxu0 %v1342
  %v1344 = vand.u32 %v46, 4294901760
  %v1345 = vsub.f32 %v46, %v1344
  %1346 = vmatprep.subr.mxu0 %v1345
  %v1347 = vand.u32 %v45, 4294901760
  %v1348 = vsub.f32 %v45, %v1347
  %1349 = vmatpush1.msra.mxu0 %v1348
  %v1350 = vand.u32 %v42, 4294901760
  %v1351 = vsub.f32 %v42, %v1350
  %1352 = vmatprep.subr.mxu0 %v1351
  %v1353 = vand.u32 %v41, 4294901760
  %v1354 = vsub.f32 %v41, %v1353
  %1355 = vmatpush1.msra.mxu0 %v1354
  %v1356 = vand.u32 %v38, 4294901760
  %v1357 = vsub.f32 %v38, %v1356
  %1358 = vmatprep.subr.mxu0 %v1357
  %v1359 = vand.u32 %v37, 4294901760
  %v1360 = vsub.f32 %v37, %v1359
  %1361 = vmatpush1.msra.mxu0 %v1360
  %v1362 = vand.u32 %v34, 4294901760
  %v1363 = vsub.f32 %v34, %v1362
  %1364 = vmatprep.subr.mxu0 %v1363
  %v1365 = vand.u32 %v33, 4294901760
  %v1366 = vsub.f32 %v33, %v1365
  %1367 = vmatpush1.msra.mxu0 %v1366
  %v1368 = vand.u32 %v30, 4294901760
  %v1369 = vsub.f32 %v30, %v1368
  %1370 = vmatprep.subr.mxu0 %v1369
  %v1371 = vand.u32 %v29, 4294901760
  %v1372 = vsub.f32 %v29, %v1371
  %1373 = vmatpush1.msra.mxu0 %v1372
  %v1374 = vand.u32 %v26, 4294901760
  %v1375 = vsub.f32 %v26, %v1374
  %1376 = vmatprep.subr.mxu0 %v1375
  %v1377 = vand.u32 %v25, 4294901760
  %v1378 = vsub.f32 %v25, %v1377
  %1379 = vmatpush1.msra.mxu0 %v1378
  %v1380 = vand.u32 %v22, 4294901760
  %v1381 = vsub.f32 %v22, %v1380
  %1382 = vmatprep.subr.mxu0 %v1381
  %v1383 = vand.u32 %v21, 4294901760
  %v1384 = vsub.f32 %v21, %v1383
  %1385 = vmatpush1.msra.mxu0 %v1384
  %v1386 = vand.u32 %v18, 4294901760
  %v1387 = vsub.f32 %v18, %v1386
  %1388 = vmatprep.subr.mxu0 %v1387
  %v1389 = vand.u32 %v17, 4294901760
  %v1390 = vsub.f32 %v17, %v1389
  %1391 = vmatpush1.msra.mxu0 %v1390
  %1392 = vmatprep.subr.mxu0 0.0
  %1393 = vmatpush2.msra.mxu0 0.0
  %1394 = vmatprep.subr.mxu0 0.0
  %1395 = vmatpush2.msra.mxu0 0.0
  %1396 = vmatprep.subr.mxu0 0.0
  %1397 = vmatpush2.msra.mxu0 0.0
  %1398 = vmatprep.subr.mxu0 0.0
  %1399 = vmatpush2.msra.mxu0 0.0
  %1400 = vmatprep.subr.mxu0 0.0
  %1401 = vmatpush2.msra.mxu0 0.0
  %1402 = vmatprep.subr.mxu0 0.0
  %1403 = vmatpush2.msra.mxu0 0.0
  %1404 = vmatprep.subr.mxu0 0.0
  %1405 = vmatpush2.msra.mxu0 0.0
  %1406 = vmatprep.subr.mxu0 0.0
  %1407 = vmatpush2.msra.mxu0 0.0
  %1408 = vmatprep.subr.mxu0 0.0
  %1409 = vmatpush2.msra.mxu0 0.0
  %1410 = vmatprep.subr.mxu0 0.0
  %1411 = vmatpush2.msra.mxu0 0.0
  %1412 = vmatprep.subr.mxu0 0.0
  %1413 = vmatpush2.msra.mxu0 0.0
  %1414 = vmatprep.subr.mxu0 0.0
  %1415 = vmatpush2.msra.mxu0 0.0
  %1416 = vmatprep.subr.mxu0 0.0
  %1417 = vmatpush2.msra.mxu0 0.0
  %1418 = vmatprep.subr.mxu0 0.0
  %1419 = vmatpush2.msra.mxu0 0.0
  %1420 = vmatprep.subr.mxu0 0.0
  %1421 = vmatpush2.msra.mxu0 0.0
  %1422 = vmatprep.subr.mxu0 0.0
  %1423 = vmatpush2.msra.mxu0 0.0
  %1424 = vmatprep.mubr.f32.mxu0 0.0
  %v1425 = vand.u32 %v14, 4294901760
  %v1426 = vsub.f32 %v14, %v1425
  %1427 = vmatmul.mubr.f32.gmra.mxu0 %v1426
  %v1428 = vpop.f32.mrf.mxu0
  %v1429 = vadd.f32 %v1292, %v1428
  %v1430 = vpop.f32.mrf.mxu0
  %v1431 = vadd.f32 %v1294, %v1430
  %1432 = vdwg.mxu0
  %v1433 = vand.u32 %v78, 4294901760
  %1434 = vmatprep.subr.mxu0 %v1433
  %v1435 = vand.u32 %v77, 4294901760
  %1436 = vmatpush1.msra.mxu0 %v1435
  %v1437 = vand.u32 %v74, 4294901760
  %1438 = vmatprep.subr.mxu0 %v1437
  %v1439 = vand.u32 %v73, 4294901760
  %1440 = vmatpush1.msra.mxu0 %v1439
  %v1441 = vand.u32 %v70, 4294901760
  %1442 = vmatprep.subr.mxu0 %v1441
  %v1443 = vand.u32 %v69, 4294901760
  %1444 = vmatpush1.msra.mxu0 %v1443
  %v1445 = vand.u32 %v66, 4294901760
  %1446 = vmatprep.subr.mxu0 %v1445
  %v1447 = vand.u32 %v65, 4294901760
  %1448 = vmatpush1.msra.mxu0 %v1447
  %v1449 = vand.u32 %v62, 4294901760
  %1450 = vmatprep.subr.mxu0 %v1449
  %v1451 = vand.u32 %v61, 4294901760
  %1452 = vmatpush1.msra.mxu0 %v1451
  %v1453 = vand.u32 %v58, 4294901760
  %1454 = vmatprep.subr.mxu0 %v1453
  %v1455 = vand.u32 %v57, 4294901760
  %1456 = vmatpush1.msra.mxu0 %v1455
  %v1457 = vand.u32 %v54, 4294901760
  %1458 = vmatprep.subr.mxu0 %v1457
  %v1459 = vand.u32 %v53, 4294901760
  %1460 = vmatpush1.msra.mxu0 %v1459
  %v1461 = vand.u32 %v50, 4294901760
  %1462 = vmatprep.subr.mxu0 %v1461
  %v1463 = vand.u32 %v49, 4294901760
  %1464 = vmatpush1.msra.mxu0 %v1463
  %v1465 = vand.u32 %v46, 4294901760
  %1466 = vmatprep.subr.mxu0 %v1465
  %v1467 = vand.u32 %v45, 4294901760
  %1468 = vmatpush1.msra.mxu0 %v1467
  %v1469 = vand.u32 %v42, 4294901760
  %1470 = vmatprep.subr.mxu0 %v1469
  %v1471 = vand.u32 %v41, 4294901760
  %1472 = vmatpush1.msra.mxu0 %v1471
  %v1473 = vand.u32 %v38, 4294901760
  %1474 = vmatprep.subr.mxu0 %v1473
  %v1475 = vand.u32 %v37, 4294901760
  %1476 = vmatpush1.msra.mxu0 %v1475
  %v1477 = vand.u32 %v34, 4294901760
  %1478 = vmatprep.subr.mxu0 %v1477
  %v1479 = vand.u32 %v33, 4294901760
  %1480 = vmatpush1.msra.mxu0 %v1479
  %v1481 = vand.u32 %v30, 4294901760
  %1482 = vmatprep.subr.mxu0 %v1481
  %v1483 = vand.u32 %v29, 4294901760
  %1484 = vmatpush1.msra.mxu0 %v1483
  %v1485 = vand.u32 %v26, 4294901760
  %1486 = vmatprep.subr.mxu0 %v1485
  %v1487 = vand.u32 %v25, 4294901760
  %1488 = vmatpush1.msra.mxu0 %v1487
  %v1489 = vand.u32 %v22, 4294901760
  %1490 = vmatprep.subr.mxu0 %v1489
  %v1491 = vand.u32 %v21, 4294901760
  %1492 = vmatpush1.msra.mxu0 %v1491
  %v1493 = vand.u32 %v18, 4294901760
  %1494 = vmatprep.subr.mxu0 %v1493
  %v1495 = vand.u32 %v17, 4294901760
  %1496 = vmatpush1.msra.mxu0 %v1495
  %1497 = vmatprep.subr.mxu0 0.0
  %1498 = vmatpush2.msra.mxu0 0.0
  %1499 = vmatprep.subr.mxu0 0.0
  %1500 = vmatpush2.msra.mxu0 0.0
  %1501 = vmatprep.subr.mxu0 0.0
  %1502 = vmatpush2.msra.mxu0 0.0
  %1503 = vmatprep.subr.mxu0 0.0
  %1504 = vmatpush2.msra.mxu0 0.0
  %1505 = vmatprep.subr.mxu0 0.0
  %1506 = vmatpush2.msra.mxu0 0.0
  %1507 = vmatprep.subr.mxu0 0.0
  %1508 = vmatpush2.msra.mxu0 0.0
  %1509 = vmatprep.subr.mxu0 0.0
  %1510 = vmatpush2.msra.mxu0 0.0
  %1511 = vmatprep.subr.mxu0 0.0
  %1512 = vmatpush2.msra.mxu0 0.0
  %1513 = vmatprep.subr.mxu0 0.0
  %1514 = vmatpush2.msra.mxu0 0.0
  %1515 = vmatprep.subr.mxu0 0.0
  %1516 = vmatpush2.msra.mxu0 0.0
  %1517 = vmatprep.subr.mxu0 0.0
  %1518 = vmatpush2.msra.mxu0 0.0
  %1519 = vmatprep.subr.mxu0 0.0
  %1520 = vmatpush2.msra.mxu0 0.0
  %1521 = vmatprep.subr.mxu0 0.0
  %1522 = vmatpush2.msra.mxu0 0.0
  %1523 = vmatprep.subr.mxu0 0.0
  %1524 = vmatpush2.msra.mxu0 0.0
  %1525 = vmatprep.subr.mxu0 0.0
  %1526 = vmatpush2.msra.mxu0 0.0
  %1527 = vmatprep.subr.mxu0 0.0
  %1528 = vmatpush2.msra.mxu0 0.0
  %1529 = vmatprep.mubr.f32.mxu0 0.0
  %v1530 = vand.u32 %v14, 4294901760
  %v1531 = vsub.f32 %v14, %v1530
  %v1532 = vand.u32 %v1531, 4294901760
  %1533 = vmatmul.mubr.f32.gmra.mxu0 %v1532
  %v1534 = vpop.f32.mrf.mxu0
  %v1535 = vadd.f32 %v1429, %v1534
  %v1536 = vpop.f32.mrf.mxu0
  %v1537 = vadd.f32 %v1431, %v1536
  %1538 = vdwg.mxu0
  %v1539 = vand.u32 %v78, 4294901760
  %v1540 = vsub.f32 %v78, %v1539
  %v1541 = vand.u32 %v1540, 4294901760
  %1542 = vmatprep.subr.mxu0 %v1541
  %v1543 = vand.u32 %v77, 4294901760
  %v1544 = vsub.f32 %v77, %v1543
  %v1545 = vand.u32 %v1544, 4294901760
  %1546 = vmatpush1.msra.mxu0 %v1545
  %v1547 = vand.u32 %v74, 4294901760
  %v1548 = vsub.f32 %v74, %v1547
  %v1549 = vand.u32 %v1548, 4294901760
  %1550 = vmatprep.subr.mxu0 %v1549
  %v1551 = vand.u32 %v73, 4294901760
  %v1552 = vsub.f32 %v73, %v1551
  %v1553 = vand.u32 %v1552, 4294901760
  %1554 = vmatpush1.msra.mxu0 %v1553
  %v1555 = vand.u32 %v70, 4294901760
  %v1556 = vsub.f32 %v70, %v1555
  %v1557 = vand.u32 %v1556, 4294901760
  %1558 = vmatprep.subr.mxu0 %v1557
  %v1559 = vand.u32 %v69, 4294901760
  %v1560 = vsub.f32 %v69, %v1559
  %v1561 = vand.u32 %v1560, 4294901760
  %1562 = vmatpush1.msra.mxu0 %v1561
  %v1563 = vand.u32 %v66, 4294901760
  %v1564 = vsub.f32 %v66, %v1563
  %v1565 = vand.u32 %v1564, 4294901760
  %1566 = vmatprep.subr.mxu0 %v1565
  %v1567 = vand.u32 %v65, 4294901760
  %v1568 = vsub.f32 %v65, %v1567
  %v1569 = vand.u32 %v1568, 4294901760
  %1570 = vmatpush1.msra.mxu0 %v1569
  %v1571 = vand.u32 %v62, 4294901760
  %v1572 = vsub.f32 %v62, %v1571
  %v1573 = vand.u32 %v1572, 4294901760
  %1574 = vmatprep.subr.mxu0 %v1573
  %v1575 = vand.u32 %v61, 4294901760
  %v1576 = vsub.f32 %v61, %v1575
  %v1577 = vand.u32 %v1576, 4294901760
  %1578 = vmatpush1.msra.mxu0 %v1577
  %v1579 = vand.u32 %v58, 4294901760
  %v1580 = vsub.f32 %v58, %v1579
  %v1581 = vand.u32 %v1580, 4294901760
  %1582 = vmatprep.subr.mxu0 %v1581
  %v1583 = vand.u32 %v57, 4294901760
  %v1584 = vsub.f32 %v57, %v1583
  %v1585 = vand.u32 %v1584, 4294901760
  %1586 = vmatpush1.msra.mxu0 %v1585
  %v1587 = vand.u32 %v54, 4294901760
  %v1588 = vsub.f32 %v54, %v1587
  %v1589 = vand.u32 %v1588, 4294901760
  %1590 = vmatprep.subr.mxu0 %v1589
  %v1591 = vand.u32 %v53, 4294901760
  %v1592 = vsub.f32 %v53, %v1591
  %v1593 = vand.u32 %v1592, 4294901760
  %1594 = vmatpush1.msra.mxu0 %v1593
  %v1595 = vand.u32 %v50, 4294901760
  %v1596 = vsub.f32 %v50, %v1595
  %v1597 = vand.u32 %v1596, 4294901760
  %1598 = vmatprep.subr.mxu0 %v1597
  %v1599 = vand.u32 %v49, 4294901760
  %v1600 = vsub.f32 %v49, %v1599
  %v1601 = vand.u32 %v1600, 4294901760
  %1602 = vmatpush1.msra.mxu0 %v1601
  %v1603 = vand.u32 %v46, 4294901760
  %v1604 = vsub.f32 %v46, %v1603
  %v1605 = vand.u32 %v1604, 4294901760
  %1606 = vmatprep.subr.mxu0 %v1605
  %v1607 = vand.u32 %v45, 4294901760
  %v1608 = vsub.f32 %v45, %v1607
  %v1609 = vand.u32 %v1608, 4294901760
  %1610 = vmatpush1.msra.mxu0 %v1609
  %v1611 = vand.u32 %v42, 4294901760
  %v1612 = vsub.f32 %v42, %v1611
  %v1613 = vand.u32 %v1612, 4294901760
  %1614 = vmatprep.subr.mxu0 %v1613
  %v1615 = vand.u32 %v41, 4294901760
  %v1616 = vsub.f32 %v41, %v1615
  %v1617 = vand.u32 %v1616, 4294901760
  %1618 = vmatpush1.msra.mxu0 %v1617
  %v1619 = vand.u32 %v38, 4294901760
  %v1620 = vsub.f32 %v38, %v1619
  %v1621 = vand.u32 %v1620, 4294901760
  %1622 = vmatprep.subr.mxu0 %v1621
  %v1623 = vand.u32 %v37, 4294901760
  %v1624 = vsub.f32 %v37, %v1623
  %v1625 = vand.u32 %v1624, 4294901760
  %1626 = vmatpush1.msra.mxu0 %v1625
  %v1627 = vand.u32 %v34, 4294901760
  %v1628 = vsub.f32 %v34, %v1627
  %v1629 = vand.u32 %v1628, 4294901760
  %1630 = vmatprep.subr.mxu0 %v1629
  %v1631 = vand.u32 %v33, 4294901760
  %v1632 = vsub.f32 %v33, %v1631
  %v1633 = vand.u32 %v1632, 4294901760
  %1634 = vmatpush1.msra.mxu0 %v1633
  %v1635 = vand.u32 %v30, 4294901760
  %v1636 = vsub.f32 %v30, %v1635
  %v1637 = vand.u32 %v1636, 4294901760
  %1638 = vmatprep.subr.mxu0 %v1637
  %v1639 = vand.u32 %v29, 4294901760
  %v1640 = vsub.f32 %v29, %v1639
  %v1641 = vand.u32 %v1640, 4294901760
  %1642 = vmatpush1.msra.mxu0 %v1641
  %v1643 = vand.u32 %v26, 4294901760
  %v1644 = vsub.f32 %v26, %v1643
  %v1645 = vand.u32 %v1644, 4294901760
  %1646 = vmatprep.subr.mxu0 %v1645
  %v1647 = vand.u32 %v25, 4294901760
  %v1648 = vsub.f32 %v25, %v1647
  %v1649 = vand.u32 %v1648, 4294901760
  %1650 = vmatpush1.msra.mxu0 %v1649
  %v1651 = vand.u32 %v22, 4294901760
  %v1652 = vsub.f32 %v22, %v1651
  %v1653 = vand.u32 %v1652, 4294901760
  %1654 = vmatprep.subr.mxu0 %v1653
  %v1655 = vand.u32 %v21, 4294901760
  %v1656 = vsub.f32 %v21, %v1655
  %v1657 = vand.u32 %v1656, 4294901760
  %1658 = vmatpush1.msra.mxu0 %v1657
  %v1659 = vand.u32 %v18, 4294901760
  %v1660 = vsub.f32 %v18, %v1659
  %v1661 = vand.u32 %v1660, 4294901760
  %1662 = vmatprep.subr.mxu0 %v1661
  %v1663 = vand.u32 %v17, 4294901760
  %v1664 = vsub.f32 %v17, %v1663
  %v1665 = vand.u32 %v1664, 4294901760
  %1666 = vmatpush1.msra.mxu0 %v1665
  %1667 = vmatprep.subr.mxu0 0.0
  %1668 = vmatpush2.msra.mxu0 0.0
  %1669 = vmatprep.subr.mxu0 0.0
  %1670 = vmatpush2.msra.mxu0 0.0
  %1671 = vmatprep.subr.mxu0 0.0
  %1672 = vmatpush2.msra.mxu0 0.0
  %1673 = vmatprep.subr.mxu0 0.0
  %1674 = vmatpush2.msra.mxu0 0.0
  %1675 = vmatprep.subr.mxu0 0.0
  %1676 = vmatpush2.msra.mxu0 0.0
  %1677 = vmatprep.subr.mxu0 0.0
  %1678 = vmatpush2.msra.mxu0 0.0
  %1679 = vmatprep.subr.mxu0 0.0
  %1680 = vmatpush2.msra.mxu0 0.0
  %1681 = vmatprep.subr.mxu0 0.0
  %1682 = vmatpush2.msra.mxu0 0.0
  %1683 = vmatprep.subr.mxu0 0.0
  %1684 = vmatpush2.msra.mxu0 0.0
  %1685 = vmatprep.subr.mxu0 0.0
  %1686 = vmatpush2.msra.mxu0 0.0
  %1687 = vmatprep.subr.mxu0 0.0
  %1688 = vmatpush2.msra.mxu0 0.0
  %1689 = vmatprep.subr.mxu0 0.0
  %1690 = vmatpush2.msra.mxu0 0.0
  %1691 = vmatprep.subr.mxu0 0.0
  %1692 = vmatpush2.msra.mxu0 0.0
  %1693 = vmatprep.subr.mxu0 0.0
  %1694 = vmatpush2.msra.mxu0 0.0
  %1695 = vmatprep.subr.mxu0 0.0
  %1696 = vmatpush2.msra.mxu0 0.0
  %1697 = vmatprep.subr.mxu0 0.0
  %1698 = vmatpush2.msra.mxu0 0.0
  %1699 = vmatprep.mubr.f32.mxu0 0.0
  %v1700 = vand.u32 %v14, 4294901760
  %1701 = vmatmul.mubr.f32.gmra.mxu0 %v1700
  %v1702 = vpop.f32.mrf.mxu0
  %v1703 = vadd.f32 %v1535, %v1702
  %v1704 = vpop.f32.mrf.mxu0
  %v1705 = vadd.f32 %v1537, %v1704
  %1706 = vdwg.mxu0
  %v1707 = vand.u32 %v78, 4294901760
  %1708 = vmatprep.subr.mxu0 %v1707
  %v1709 = vand.u32 %v77, 4294901760
  %1710 = vmatpush1.msra.mxu0 %v1709
  %v1711 = vand.u32 %v74, 4294901760
  %1712 = vmatprep.subr.mxu0 %v1711
  %v1713 = vand.u32 %v73, 4294901760
  %1714 = vmatpush1.msra.mxu0 %v1713
  %v1715 = vand.u32 %v70, 4294901760
  %1716 = vmatprep.subr.mxu0 %v1715
  %v1717 = vand.u32 %v69, 4294901760
  %1718 = vmatpush1.msra.mxu0 %v1717
  %v1719 = vand.u32 %v66, 4294901760
  %1720 = vmatprep.subr.mxu0 %v1719
  %v1721 = vand.u32 %v65, 4294901760
  %1722 = vmatpush1.msra.mxu0 %v1721
  %v1723 = vand.u32 %v62, 4294901760
  %1724 = vmatprep.subr.mxu0 %v1723
  %v1725 = vand.u32 %v61, 4294901760
  %1726 = vmatpush1.msra.mxu0 %v1725
  %v1727 = vand.u32 %v58, 4294901760
  %1728 = vmatprep.subr.mxu0 %v1727
  %v1729 = vand.u32 %v57, 4294901760
  %1730 = vmatpush1.msra.mxu0 %v1729
  %v1731 = vand.u32 %v54, 4294901760
  %1732 = vmatprep.subr.mxu0 %v1731
  %v1733 = vand.u32 %v53, 4294901760
  %1734 = vmatpush1.msra.mxu0 %v1733
  %v1735 = vand.u32 %v50, 4294901760
  %1736 = vmatprep.subr.mxu0 %v1735
  %v1737 = vand.u32 %v49, 4294901760
  %1738 = vmatpush1.msra.mxu0 %v1737
  %v1739 = vand.u32 %v46, 4294901760
  %1740 = vmatprep.subr.mxu0 %v1739
  %v1741 = vand.u32 %v45, 4294901760
  %1742 = vmatpush1.msra.mxu0 %v1741
  %v1743 = vand.u32 %v42, 4294901760
  %1744 = vmatprep.subr.mxu0 %v1743
  %v1745 = vand.u32 %v41, 4294901760
  %1746 = vmatpush1.msra.mxu0 %v1745
  %v1747 = vand.u32 %v38, 4294901760
  %1748 = vmatprep.subr.mxu0 %v1747
  %v1749 = vand.u32 %v37, 4294901760
  %1750 = vmatpush1.msra.mxu0 %v1749
  %v1751 = vand.u32 %v34, 4294901760
  %1752 = vmatprep.subr.mxu0 %v1751
  %v1753 = vand.u32 %v33, 4294901760
  %1754 = vmatpush1.msra.mxu0 %v1753
  %v1755 = vand.u32 %v30, 4294901760
  %1756 = vmatprep.subr.mxu0 %v1755
  %v1757 = vand.u32 %v29, 4294901760
  %1758 = vmatpush1.msra.mxu0 %v1757
  %v1759 = vand.u32 %v26, 4294901760
  %1760 = vmatprep.subr.mxu0 %v1759
  %v1761 = vand.u32 %v25, 4294901760
  %1762 = vmatpush1.msra.mxu0 %v1761
  %v1763 = vand.u32 %v22, 4294901760
  %1764 = vmatprep.subr.mxu0 %v1763
  %v1765 = vand.u32 %v21, 4294901760
  %1766 = vmatpush1.msra.mxu0 %v1765
  %v1767 = vand.u32 %v18, 4294901760
  %1768 = vmatprep.subr.mxu0 %v1767
  %v1769 = vand.u32 %v17, 4294901760
  %1770 = vmatpush1.msra.mxu0 %v1769
  %1771 = vmatprep.subr.mxu0 0.0
  %1772 = vmatpush2.msra.mxu0 0.0
  %1773 = vmatprep.subr.mxu0 0.0
  %1774 = vmatpush2.msra.mxu0 0.0
  %1775 = vmatprep.subr.mxu0 0.0
  %1776 = vmatpush2.msra.mxu0 0.0
  %1777 = vmatprep.subr.mxu0 0.0
  %1778 = vmatpush2.msra.mxu0 0.0
  %1779 = vmatprep.subr.mxu0 0.0
  %1780 = vmatpush2.msra.mxu0 0.0
  %1781 = vmatprep.subr.mxu0 0.0
  %1782 = vmatpush2.msra.mxu0 0.0
  %1783 = vmatprep.subr.mxu0 0.0
  %1784 = vmatpush2.msra.mxu0 0.0
  %1785 = vmatprep.subr.mxu0 0.0
  %1786 = vmatpush2.msra.mxu0 0.0
  %1787 = vmatprep.subr.mxu0 0.0
  %1788 = vmatpush2.msra.mxu0 0.0
  %1789 = vmatprep.subr.mxu0 0.0
  %1790 = vmatpush2.msra.mxu0 0.0
  %1791 = vmatprep.subr.mxu0 0.0
  %1792 = vmatpush2.msra.mxu0 0.0
  %1793 = vmatprep.subr.mxu0 0.0
  %1794 = vmatpush2.msra.mxu0 0.0
  %1795 = vmatprep.subr.mxu0 0.0
  %1796 = vmatpush2.msra.mxu0 0.0
  %1797 = vmatprep.subr.mxu0 0.0
  %1798 = vmatpush2.msra.mxu0 0.0
  %1799 = vmatprep.subr.mxu0 0.0
  %1800 = vmatpush2.msra.mxu0 0.0
  %1801 = vmatprep.subr.mxu0 0.0
  %1802 = vmatpush2.msra.mxu0 0.0
  %1803 = vmatprep.mubr.f32.mxu0 0.0
  %v1804 = vand.u32 %v14, 4294901760
  %1805 = vmatmul.mubr.f32.gmra.mxu0 %v1804
  %v1806 = vpop.f32.mrf.mxu0
  %v1807 = vadd.f32 %v1703, %v1806
  %v1808 = vpop.f32.mrf.mxu0
  %v1809 = vadd.f32 %v1705, %v1808
  %1810 = vdwg.mxu0
  %1811 = vst [vmem:[%s3] sm:$0xff] %v952
  %1812 = vst [vmem:[%s3 + $0x8] sm:$0xff] %v954
  %1813 = vst [vmem:[%s3 + $0x10] sm:$0xff] %v1807
  %1814 = vst [vmem:[%s3 + $0x18] sm:$0xff] %v1809
  // Predicated region
  $region14: #{model_forward.1} parent=0 // pred_check
    _
  $region15: #{model_forward.1} parent=0 // pred_check_branch
    %1816 = sbr.rel (0) target = $region17
  $region16: #{model_forward.1} parent=0 // pred_region
    _
  $region17: #{model_forward.1} parent=0 // pred_fallthru
    _
  // Predicated region
  $region18: #{model_forward.1} parent=0 // pred_check
    _
  $region19: #{model_forward.1} parent=0 // pred_check_branch
    %1818 = sbr.rel (0) target = $region21
  $region20: #{model_forward.1} parent=0 // pred_region
    _
  $region21: #{model_forward.1} parent=0 // pred_fallthru
    _

</llo_original>
